<compile_context>
chip_gen: v5e
topology: v5e:2x2
jax: 0.10.0
libtpu: 0.0.40
codegen_flags: <defaults>
</compile_context>

<pallas_src>
import jax
import jax.numpy as jnp
from jax import lax
from jax.experimental import pallas as pl
from jax.experimental.pallas import tpu as pltpu


# --------------------------------------------------------------------------- #
# Pallas kernel
# --------------------------------------------------------------------------- #
def _make_kernel(H, W, has_projection):
    """ResidualBlock kernel for H x W images, (C, L) lane-dense blocks."""

    def kernel(x_ref, hidx_ref, widx_ref,
               dw1_ref, pw1_ref, b1_ref,
               dw2_ref, pw2_ref, b2_ref, *rest):
        if has_projection:
            ws_ref, bs_ref, o_ref = rest
        else:
            (o_ref,) = rest

        L = x_ref.shape[1]                                   # NB * H * W (static)
        x = x_ref[...].astype(jnp.float32)                   # (Cin, L)

        # ---- border masks for the 3x3 taps (replaces zero padding) ---------
        h = hidx_ref[...]                                    # (1, L) int32 row index
        w = widx_ref[...]                                    # (1, L) int32 col index
        mh = {-1: h >= 1, 1: h <= H - 2}                     # source row in range
        mw = {-1: w >= 1, 1: w <= W - 2}                     # source col in range
        masks = {}
        for dh in (-1, 0, 1):
            for dw in (-1, 0, 1):
                if dh == 0 and dw == 0:
                    continue
                parts = [m for m in (mh.get(dh), mw.get(dw)) if m is not None]
                masks[(dh, dw)] = (parts[0] if len(parts) == 1
                                   else jnp.logical_and(parts[0], parts[1]))

        def depthwise3x3(v, dwT):
            # v: (C, L); dwT: (C, 9) with tap index t = kh*3 + kw.
            acc = v * dwT[:, 4:5]                            # centre tap (1,1)
            for dh in (-1, 0, 1):
                for dw in (-1, 0, 1):
                    if dh == 0 and dw == 0:
                        continue
                    t = (dh + 1) * 3 + (dw + 1)
                    # neighbour value v[:, p + dh*W + dw] via an XLU lane rotate;
                    # wrap-around / cross-image lanes are zeroed by the mask.
                    nbr = pltpu.roll(v, shift=(-(dh * W + dw)) % L, axis=1)
                    acc = acc + jnp.where(masks[(dh, dw)], nbr, 0.0) * dwT[:, t:t + 1]
            return acc

        def pointwise(v, wT):
            # v: (Cin, L); wT: (Cout, Cin) -> (Cout, L) via Cin VPU broadcast-FMAs.
            y = v[0:1, :] * wT[:, 0:1]
            for c in range(1, wT.shape[1]):
                y = y + v[c:c + 1, :] * wT[:, c:c + 1]
            return y

        # ---- SeparableConvolution 1: dw3x3 -> pw1x1 (BN scale folded) -> +b -> ReLU
        y1 = jnp.maximum(pointwise(depthwise3x3(x, dw1_ref[...]), pw1_ref[...])
                         + b1_ref[...], 0.0)
        # ---- SeparableConvolution 2
        y2 = jnp.maximum(pointwise(depthwise3x3(y1, dw2_ref[...]), pw2_ref[...])
                         + b2_ref[...], 0.0)
        # ---- shortcut
        if has_projection:
            r = pointwise(x, ws_ref[...]) + bs_ref[...]      # 1x1 conv, BN folded
        else:
            r = x                                            # identity: no extra work
        # ---- residual add + final ReLU (lane-dense store)
        o_ref[...] = jnp.maximum(y2 + r, 0.0).astype(o_ref.dtype)

    return kernel


# --------------------------------------------------------------------------- #
# Wrapper
# --------------------------------------------------------------------------- #
def _images_per_step(N, Cin, Cout, HW):
    """Images per grid step: big blocks to amortize per-step overhead, capped
    by a conservative VMEM budget (double-buffered I/O + live intermediates)."""
    if HW % 128 != 0:
        return N                       # single full-extent block on the lane axis
    per_img = 4 * HW * (2 * Cin + 2 * Cout + 6 * max(Cin, Cout))
    nb = max(1, min(N, (24 * 1024 * 1024) // per_img))
    while N % nb:
        nb -= 1
    return nb


def residual_block_pallas(x_nchw, params):
    """ResidualBlock forward (stride=1, eval-mode BN).

    x_nchw: (N, Cin, H, W) -> (N, Cout, H, W), matching the PyTorch module.
    """
    N, Cin, H, W = x_nchw.shape
    Cout = params['pw1'].shape[1]
    HW = H * W
    has_projection = (Cin != Cout)     # module: projection iff stride!=1 or Cin!=Cout

    nb = _images_per_step(N, Cin, Cout, HW)
    LB = nb * HW
    grid = (N // nb,)

    # channels-on-sublane / spatial-on-lane layout: (C, N*H*W).
    # (If this block were stacked, this layout would be kept end-to-end.)
    x_cm = jnp.transpose(x_nchw, (1, 0, 2, 3)).reshape(Cin, N * HW)

    # ---- host-side weight prep: fold BN scales into the 1x1 weights ---------
    dw1T = params['dw1'].reshape(9, Cin).T                     # (Cin, 9)
    dw2T = params['dw2'].reshape(9, Cout).T                    # (Cout, 9)
    pw1T = params['pw1'].T * params['s1'][:, None]             # (Cout, Cin)
    pw2T = params['pw2'].T * params['s2'][:, None]             # (Cout, Cout)
    b1 = params['b1'][:, None]                                 # (Cout, 1)
    b2 = params['b2'][:, None]

    # per-pixel (h, w) indices for in-kernel border masking (replaces jnp.pad)
    pix = jnp.arange(HW, dtype=jnp.int32)
    h_idx = jnp.tile((pix // W).reshape(1, HW), (1, nb))       # (1, LB)
    w_idx = jnp.tile((pix % W).reshape(1, HW), (1, nb))        # (1, LB)

    args = [x_cm, h_idx, w_idx, dw1T, pw1T, b1, dw2T, pw2T, b2]
    in_specs = [
        pl.BlockSpec((Cin, LB), lambda i: (0, i)),             # activations
        pl.BlockSpec((1, LB), lambda i: (0, 0)),               # h index
        pl.BlockSpec((1, LB), lambda i: (0, 0)),               # w index
        pl.BlockSpec((Cin, 9), lambda i: (0, 0)),              # dw1
        pl.BlockSpec((Cout, Cin), lambda i: (0, 0)),           # pw1 (BN folded)
        pl.BlockSpec((Cout, 1), lambda i: (0, 0)),             # b1
        pl.BlockSpec((Cout, 9), lambda i: (0, 0)),             # dw2
        pl.BlockSpec((Cout, Cout), lambda i: (0, 0)),          # pw2 (BN folded)
        pl.BlockSpec((Cout, 1), lambda i: (0, 0)),             # b2
    ]
    if has_projection:
        wsT = params['ws'].T * params['ss'][:, None]           # (Cout, Cin)
        bs = params['bs'][:, None]
        args += [wsT, bs]
        in_specs += [pl.BlockSpec((Cout, Cin), lambda i: (0, 0)),
                     pl.BlockSpec((Cout, 1), lambda i: (0, 0))]

    out_cm = pl.pallas_call(
        _make_kernel(H, W, has_projection),
        out_shape=jax.ShapeDtypeStruct((Cout, N * HW), x_nchw.dtype),
        grid_spec=pltpu.PrefetchScalarGridSpec(
            num_scalar_prefetch=0,
            grid=grid,
            in_specs=in_specs,
            out_specs=pl.BlockSpec((Cout, LB), lambda i: (0, i)),
        ),
        compiler_params=pltpu.CompilerParams(
            dimension_semantics=("parallel",),        # v7x: shard batch over 2 TCs
            vmem_limit_bytes=32 * 1024 * 1024,        # safe on v5e/v6e/v7x
        ),
    )(*args)

    return out_cm.reshape(Cout, N, H, W).transpose(1, 0, 2, 3)   # back to NCHW


# --------------------------------------------------------------------------- #
# Parameter construction (deterministic) + pure-JAX reference
# --------------------------------------------------------------------------- #
def fold_bn(gamma, beta, mean, var, eps=1e-5):
    scale = gamma / jnp.sqrt(var + eps)
    return scale, beta - mean * scale


def make_params(key, in_channels, out_channels):
    f = jnp.float32
    ks = jax.random.split(key, 17)
    dw1 = 0.2 * jax.random.normal(ks[0], (3, 3, in_channels), f)
    pw1 = 0.2 * jax.random.normal(ks[1], (in_channels, out_channels), f)
    s1, b1 = fold_bn(1.0 + 0.1 * jax.random.normal(ks[2], (out_channels,), f),
                     0.1 * jax.random.normal(ks[3], (out_channels,), f),
                     0.1 * jax.random.normal(ks[4], (out_channels,), f),
                     0.5 + jax.random.uniform(ks[5], (out_channels,), f))
    dw2 = 0.2 * jax.random.normal(ks[6], (3, 3, out_channels), f)
    pw2 = 0.2 * jax.random.normal(ks[7], (out_channels, out_channels), f)
    s2, b2 = fold_bn(1.0 + 0.1 * jax.random.normal(ks[8], (out_channels,), f),
                     0.1 * jax.random.normal(ks[9], (out_channels,), f),
                     0.1 * jax.random.normal(ks[10], (out_channels,), f),
                     0.5 + jax.random.uniform(ks[11], (out_channels,), f))
    p = dict(dw1=dw1, pw1=pw1, s1=s1, b1=b1, dw2=dw2, pw2=pw2, s2=s2, b2=b2)
    if in_channels != out_channels:                     # projection shortcut
        ws = 0.2 * jax.random.normal(ks[12], (in_channels, out_channels), f)
        ss, bs = fold_bn(1.0 + 0.1 * jax.random.normal(ks[13], (out_channels,), f),
                         0.1 * jax.random.normal(ks[14], (out_channels,), f),
                         0.1 * jax.random.normal(ks[15], (out_channels,), f),
                         0.5 + jax.random.uniform(ks[16], (out_channels,), f))
        p.update(ws=ws, ss=ss, bs=bs)
    return p


def sepconv_ref(x, dw, pw, scale, bias):
    Cin = x.shape[1]
    wd = jnp.transpose(dw, (2, 0, 1))[:, None, :, :]            # (Cin, 1, 3, 3)
    y = lax.conv_general_dilated(x, wd, (1, 1), 'SAME',
                                 feature_group_count=Cin,
                                 dimension_numbers=('NCHW', 'OIHW', 'NCHW'))
    wp = jnp.transpose(pw, (1, 0))[:, :, None, None]            # (Cout, Cin, 1, 1)
    y = lax.conv_general_dilated(y, wp, (1, 1), 'SAME',
                                 dimension_numbers=('NCHW', 'OIHW', 'NCHW'))
    y = y * scale[None, :, None, None] + bias[None, :, None, None]
    return jnp.maximum(y, 0.0)


def residual_block_ref(x, p):
    if 'ws' in p:
        wp = jnp.transpose(p['ws'], (1, 0))[:, :, None, None]
        r = lax.conv_general_dilated(x, wp, (1, 1), 'SAME',
                                     dimension_numbers=('NCHW', 'OIHW', 'NCHW'))
        r = r * p['ss'][None, :, None, None] + p['bs'][None, :, None, None]
    else:
        r = x
    out = sepconv_ref(x, p['dw1'], p['pw1'], p['s1'], p['b1'])
    out = sepconv_ref(out, p['dw2'], p['pw2'], p['s2'], p['b2'])
    return jnp.maximum(out + r, 0.0)


# --------------------------------------------------------------------------- #
if __name__ == "__main__":
    key = jax.random.PRNGKey(0)
    kx, kp, kx2, kp2 = jax.random.split(key, 4)

    # projection-shortcut case (in_channels != out_channels)
    N, Cin, Cout, H, W = 2, 4, 8, 16, 16
    x = jax.random.normal(kx, (N, Cin, H, W), jnp.float32)
    params = make_params(kp, Cin, Cout)
    out = jax.block_until_ready(residual_block_pallas(x, params))
    ref = jax.block_until_ready(residual_block_ref(x, params))
    assert out.shape == (N, Cout, H, W)
    assert jnp.allclose(out, ref, rtol=1e-3, atol=1e-3), \
        f"max abs diff {jnp.max(jnp.abs(out - ref))}"

    # identity-shortcut case (in_channels == out_channels): no projection pass
    x2 = jax.random.normal(kx2, (N, Cout, H, W), jnp.float32)
    params2 = make_params(kp2, Cout, Cout)
    out2 = jax.block_until_ready(residual_block_pallas(x2, params2))
    ref2 = jax.block_until_ready(residual_block_ref(x2, params2))
    assert jnp.allclose(out2, ref2, rtol=1e-3, atol=1e-3), \
        f"max abs diff {jnp.max(jnp.abs(out2 - ref2))}"

    print("KERNEL_OK")
</pallas_src>

<mosaic_0001>
module attributes {stable_mosaic.version = 11 : i64} {
  func.func @kernel(%arg0: i32, %arg1: memref<4x512xf32, #tpu.memory_space<vmem>>, %arg2: memref<1x512xi32, #tpu.memory_space<vmem>>, %arg3: memref<1x512xi32, #tpu.memory_space<vmem>>, %arg4: memref<4x9xf32, #tpu.memory_space<vmem>>, %arg5: memref<8x4xf32, #tpu.memory_space<vmem>>, %arg6: memref<8x1xf32, #tpu.memory_space<vmem>>, %arg7: memref<8x9xf32, #tpu.memory_space<vmem>>, %arg8: memref<8x8xf32, #tpu.memory_space<vmem>>, %arg9: memref<8x1xf32, #tpu.memory_space<vmem>>, %arg10: memref<8x4xf32, #tpu.memory_space<vmem>>, %arg11: memref<8x1xf32, #tpu.memory_space<vmem>>, %arg12: memref<8x512xf32, #tpu.memory_space<vmem>>) attributes {dimension_semantics = [#tpu.dimension_semantics<parallel>], iteration_bounds = array<i64: 1>, scalar_prefetch = 0 : i64, scratch_operands = 0 : i64, tpu.core_type = #tpu.core_type<tc>, window_params = [{transform_indices = @transform_0, window_bounds = array<i64: 4, 512>}, {pipeline_mode = #tpu.pipeline_mode<synchronous>, transform_indices = @transform_1, window_bounds = array<i64: 1, 512>}, {pipeline_mode = #tpu.pipeline_mode<synchronous>, transform_indices = @transform_2, window_bounds = array<i64: 1, 512>}, {pipeline_mode = #tpu.pipeline_mode<synchronous>, transform_indices = @transform_3, window_bounds = array<i64: 4, 9>}, {pipeline_mode = #tpu.pipeline_mode<synchronous>, transform_indices = @transform_4, window_bounds = array<i64: 8, 4>}, {pipeline_mode = #tpu.pipeline_mode<synchronous>, transform_indices = @transform_5, window_bounds = array<i64: 8, 1>}, {pipeline_mode = #tpu.pipeline_mode<synchronous>, transform_indices = @transform_6, window_bounds = array<i64: 8, 9>}, {pipeline_mode = #tpu.pipeline_mode<synchronous>, transform_indices = @transform_7, window_bounds = array<i64: 8, 8>}, {pipeline_mode = #tpu.pipeline_mode<synchronous>, transform_indices = @transform_8, window_bounds = array<i64: 8, 1>}, {pipeline_mode = #tpu.pipeline_mode<synchronous>, transform_indices = @transform_9, window_bounds = array<i64: 8, 4>}, {pipeline_mode = #tpu.pipeline_mode<synchronous>, transform_indices = @transform_10, window_bounds = array<i64: 8, 1>}, {transform_indices = @transform_11, window_bounds = array<i64: 8, 512>}]} {
    %c0 = arith.constant 0 : index
    %c0_0 = arith.constant 0 : index
    %0 = vector.load %arg1[%c0, %c0_0] : memref<4x512xf32, #tpu.memory_space<vmem>>, vector<4x512xf32>
    %c0_1 = arith.constant 0 : index
    %c0_2 = arith.constant 0 : index
    %1 = vector.load %arg2[%c0_1, %c0_2] : memref<1x512xi32, #tpu.memory_space<vmem>>, vector<1x512xi32>
    %c0_3 = arith.constant 0 : index
    %c0_4 = arith.constant 0 : index
    %2 = vector.load %arg3[%c0_3, %c0_4] : memref<1x512xi32, #tpu.memory_space<vmem>>, vector<1x512xi32>
    %c1_i32 = arith.constant 1 : i32
    %3 = vector.broadcast %c1_i32 : i32 to vector<1x512xi32>
    %4 = arith.cmpi sge, %1, %3 : vector<1x512xi32>
    %c14_i32 = arith.constant 14 : i32
    %5 = vector.broadcast %c14_i32 : i32 to vector<1x512xi32>
    %6 = arith.cmpi sle, %1, %5 : vector<1x512xi32>
    %c1_i32_5 = arith.constant 1 : i32
    %7 = vector.broadcast %c1_i32_5 : i32 to vector<1x512xi32>
    %8 = arith.cmpi sge, %2, %7 : vector<1x512xi32>
    %c14_i32_6 = arith.constant 14 : i32
    %9 = vector.broadcast %c14_i32_6 : i32 to vector<1x512xi32>
    %10 = arith.cmpi sle, %2, %9 : vector<1x512xi32>
    %11 = arith.andi %4, %8 : vector<1x512xi1>
    %12 = arith.andi %4, %10 : vector<1x512xi1>
    %13 = arith.andi %6, %8 : vector<1x512xi1>
    %14 = arith.andi %6, %10 : vector<1x512xi1>
    %c0_7 = arith.constant 0 : index
    %c0_8 = arith.constant 0 : index
    %15 = vector.load %arg4[%c0_7, %c0_8] : memref<4x9xf32, #tpu.memory_space<vmem>>, vector<4x9xf32>
    %16 = vector.extract_strided_slice %15 {offsets = [0, 4], sizes = [4, 1], strides = [1, 1]} : vector<4x9xf32> to vector<4x1xf32>
    %17 = vector.broadcast %16 : vector<4x1xf32> to vector<4x512xf32>
    %18 = arith.mulf %0, %17 : vector<4x512xf32>
    %c17_i32 = arith.constant 17 : i32
    %19 = tpu.dynamic_rotate %0 by %c17_i32 dim 1 : vector<4x512xf32>, i32 -> vector<4x512xf32>
    %cst = arith.constant 0.000000e+00 : f32
    %20 = vector.shape_cast %11 : vector<1x512xi1> to vector<1x512xi1>
    %21 = vector.broadcast %20 : vector<1x512xi1> to vector<4x512xi1>
    %22 = vector.broadcast %cst : f32 to vector<4x512xf32>
    %23 = arith.select %21, %19, %22 : vector<4x512xi1>, vector<4x512xf32>
    %24 = vector.extract_strided_slice %15 {offsets = [0, 0], sizes = [4, 1], strides = [1, 1]} : vector<4x9xf32> to vector<4x1xf32>
    %25 = vector.broadcast %24 : vector<4x1xf32> to vector<4x512xf32>
    %26 = arith.mulf %23, %25 : vector<4x512xf32>
    %27 = arith.addf %18, %26 : vector<4x512xf32>
    %c16_i32 = arith.constant 16 : i32
    %28 = tpu.dynamic_rotate %0 by %c16_i32 dim 1 : vector<4x512xf32>, i32 -> vector<4x512xf32>
    %cst_9 = arith.constant 0.000000e+00 : f32
    %29 = vector.shape_cast %4 : vector<1x512xi1> to vector<1x512xi1>
    %30 = vector.broadcast %29 : vector<1x512xi1> to vector<4x512xi1>
    %31 = vector.broadcast %cst_9 : f32 to vector<4x512xf32>
    %32 = arith.select %30, %28, %31 : vector<4x512xi1>, vector<4x512xf32>
    %33 = vector.extract_strided_slice %15 {offsets = [0, 1], sizes = [4, 1], strides = [1, 1]} : vector<4x9xf32> to vector<4x1xf32>
    %34 = vector.broadcast %33 : vector<4x1xf32> to vector<4x512xf32>
    %35 = arith.mulf %32, %34 : vector<4x512xf32>
    %36 = arith.addf %27, %35 : vector<4x512xf32>
    %c15_i32 = arith.constant 15 : i32
    %37 = tpu.dynamic_rotate %0 by %c15_i32 dim 1 : vector<4x512xf32>, i32 -> vector<4x512xf32>
    %cst_10 = arith.constant 0.000000e+00 : f32
    %38 = vector.shape_cast %12 : vector<1x512xi1> to vector<1x512xi1>
    %39 = vector.broadcast %38 : vector<1x512xi1> to vector<4x512xi1>
    %40 = vector.broadcast %cst_10 : f32 to vector<4x512xf32>
    %41 = arith.select %39, %37, %40 : vector<4x512xi1>, vector<4x512xf32>
    %42 = vector.extract_strided_slice %15 {offsets = [0, 2], sizes = [4, 1], strides = [1, 1]} : vector<4x9xf32> to vector<4x1xf32>
    %43 = vector.broadcast %42 : vector<4x1xf32> to vector<4x512xf32>
    %44 = arith.mulf %41, %43 : vector<4x512xf32>
    %45 = arith.addf %36, %44 : vector<4x512xf32>
    %c1_i32_11 = arith.constant 1 : i32
    %46 = tpu.dynamic_rotate %0 by %c1_i32_11 dim 1 : vector<4x512xf32>, i32 -> vector<4x512xf32>
    %cst_12 = arith.constant 0.000000e+00 : f32
    %47 = vector.shape_cast %8 : vector<1x512xi1> to vector<1x512xi1>
    %48 = vector.broadcast %47 : vector<1x512xi1> to vector<4x512xi1>
    %49 = vector.broadcast %cst_12 : f32 to vector<4x512xf32>
    %50 = arith.select %48, %46, %49 : vector<4x512xi1>, vector<4x512xf32>
    %51 = vector.extract_strided_slice %15 {offsets = [0, 3], sizes = [4, 1], strides = [1, 1]} : vector<4x9xf32> to vector<4x1xf32>
    %52 = vector.broadcast %51 : vector<4x1xf32> to vector<4x512xf32>
    %53 = arith.mulf %50, %52 : vector<4x512xf32>
    %54 = arith.addf %45, %53 : vector<4x512xf32>
    %c511_i32 = arith.constant 511 : i32
    %55 = tpu.dynamic_rotate %0 by %c511_i32 dim 1 : vector<4x512xf32>, i32 -> vector<4x512xf32>
    %cst_13 = arith.constant 0.000000e+00 : f32
    %56 = vector.shape_cast %10 : vector<1x512xi1> to vector<1x512xi1>
    %57 = vector.broadcast %56 : vector<1x512xi1> to vector<4x512xi1>
    %58 = vector.broadcast %cst_13 : f32 to vector<4x512xf32>
    %59 = arith.select %57, %55, %58 : vector<4x512xi1>, vector<4x512xf32>
    %60 = vector.extract_strided_slice %15 {offsets = [0, 5], sizes = [4, 1], strides = [1, 1]} : vector<4x9xf32> to vector<4x1xf32>
    %61 = vector.broadcast %60 : vector<4x1xf32> to vector<4x512xf32>
    %62 = arith.mulf %59, %61 : vector<4x512xf32>
    %63 = arith.addf %54, %62 : vector<4x512xf32>
    %c497_i32 = arith.constant 497 : i32
    %64 = tpu.dynamic_rotate %0 by %c497_i32 dim 1 : vector<4x512xf32>, i32 -> vector<4x512xf32>
    %cst_14 = arith.constant 0.000000e+00 : f32
    %65 = vector.shape_cast %13 : vector<1x512xi1> to vector<1x512xi1>
    %66 = vector.broadcast %65 : vector<1x512xi1> to vector<4x512xi1>
    %67 = vector.broadcast %cst_14 : f32 to vector<4x512xf32>
    %68 = arith.select %66, %64, %67 : vector<4x512xi1>, vector<4x512xf32>
    %69 = vector.extract_strided_slice %15 {offsets = [0, 6], sizes = [4, 1], strides = [1, 1]} : vector<4x9xf32> to vector<4x1xf32>
    %70 = vector.broadcast %69 : vector<4x1xf32> to vector<4x512xf32>
    %71 = arith.mulf %68, %70 : vector<4x512xf32>
    %72 = arith.addf %63, %71 : vector<4x512xf32>
    %c496_i32 = arith.constant 496 : i32
    %73 = tpu.dynamic_rotate %0 by %c496_i32 dim 1 : vector<4x512xf32>, i32 -> vector<4x512xf32>
    %cst_15 = arith.constant 0.000000e+00 : f32
    %74 = vector.shape_cast %6 : vector<1x512xi1> to vector<1x512xi1>
    %75 = vector.broadcast %74 : vector<1x512xi1> to vector<4x512xi1>
    %76 = vector.broadcast %cst_15 : f32 to vector<4x512xf32>
    %77 = arith.select %75, %73, %76 : vector<4x512xi1>, vector<4x512xf32>
    %78 = vector.extract_strided_slice %15 {offsets = [0, 7], sizes = [4, 1], strides = [1, 1]} : vector<4x9xf32> to vector<4x1xf32>
    %79 = vector.broadcast %78 : vector<4x1xf32> to vector<4x512xf32>
    %80 = arith.mulf %77, %79 : vector<4x512xf32>
    %81 = arith.addf %72, %80 : vector<4x512xf32>
    %c495_i32 = arith.constant 495 : i32
    %82 = tpu.dynamic_rotate %0 by %c495_i32 dim 1 : vector<4x512xf32>, i32 -> vector<4x512xf32>
    %cst_16 = arith.constant 0.000000e+00 : f32
    %83 = vector.shape_cast %14 : vector<1x512xi1> to vector<1x512xi1>
    %84 = vector.broadcast %83 : vector<1x512xi1> to vector<4x512xi1>
    %85 = vector.broadcast %cst_16 : f32 to vector<4x512xf32>
    %86 = arith.select %84, %82, %85 : vector<4x512xi1>, vector<4x512xf32>
    %87 = vector.extract_strided_slice %15 {offsets = [0, 8], sizes = [4, 1], strides = [1, 1]} : vector<4x9xf32> to vector<4x1xf32>
    %88 = vector.broadcast %87 : vector<4x1xf32> to vector<4x512xf32>
    %89 = arith.mulf %86, %88 : vector<4x512xf32>
    %90 = arith.addf %81, %89 : vector<4x512xf32>
    %c0_17 = arith.constant 0 : index
    %c0_18 = arith.constant 0 : index
    %91 = vector.load %arg5[%c0_17, %c0_18] : memref<8x4xf32, #tpu.memory_space<vmem>>, vector<8x4xf32>
    %92 = vector.extract_strided_slice %90 {offsets = [0, 0], sizes = [1, 512], strides = [1, 1]} : vector<4x512xf32> to vector<1x512xf32>
    %93 = vector.extract_strided_slice %91 {offsets = [0, 0], sizes = [8, 1], strides = [1, 1]} : vector<8x4xf32> to vector<8x1xf32>
    %94 = vector.broadcast %92 : vector<1x512xf32> to vector<8x512xf32>
    %95 = vector.broadcast %93 : vector<8x1xf32> to vector<8x512xf32>
    %96 = arith.mulf %94, %95 : vector<8x512xf32>
    %97 = vector.extract_strided_slice %90 {offsets = [1, 0], sizes = [1, 512], strides = [1, 1]} : vector<4x512xf32> to vector<1x512xf32>
    %98 = vector.extract_strided_slice %91 {offsets = [0, 1], sizes = [8, 1], strides = [1, 1]} : vector<8x4xf32> to vector<8x1xf32>
    %99 = vector.broadcast %97 : vector<1x512xf32> to vector<8x512xf32>
    %100 = vector.broadcast %98 : vector<8x1xf32> to vector<8x512xf32>
    %101 = arith.mulf %99, %100 : vector<8x512xf32>
    %102 = arith.addf %96, %101 : vector<8x512xf32>
    %103 = vector.extract_strided_slice %90 {offsets = [2, 0], sizes = [1, 512], strides = [1, 1]} : vector<4x512xf32> to vector<1x512xf32>
    %104 = vector.extract_strided_slice %91 {offsets = [0, 2], sizes = [8, 1], strides = [1, 1]} : vector<8x4xf32> to vector<8x1xf32>
    %105 = vector.broadcast %103 : vector<1x512xf32> to vector<8x512xf32>
    %106 = vector.broadcast %104 : vector<8x1xf32> to vector<8x512xf32>
    %107 = arith.mulf %105, %106 : vector<8x512xf32>
    %108 = arith.addf %102, %107 : vector<8x512xf32>
    %109 = vector.extract_strided_slice %90 {offsets = [3, 0], sizes = [1, 512], strides = [1, 1]} : vector<4x512xf32> to vector<1x512xf32>
    %110 = vector.extract_strided_slice %91 {offsets = [0, 3], sizes = [8, 1], strides = [1, 1]} : vector<8x4xf32> to vector<8x1xf32>
    %111 = vector.broadcast %109 : vector<1x512xf32> to vector<8x512xf32>
    %112 = vector.broadcast %110 : vector<8x1xf32> to vector<8x512xf32>
    %113 = arith.mulf %111, %112 : vector<8x512xf32>
    %114 = arith.addf %108, %113 : vector<8x512xf32>
    %c0_19 = arith.constant 0 : index
    %c0_20 = arith.constant 0 : index
    %115 = vector.load %arg6[%c0_19, %c0_20] : memref<8x1xf32, #tpu.memory_space<vmem>>, vector<8x1xf32>
    %116 = vector.broadcast %115 : vector<8x1xf32> to vector<8x512xf32>
    %117 = arith.addf %114, %116 : vector<8x512xf32>
    %cst_21 = arith.constant 0.000000e+00 : f32
    %118 = vector.broadcast %cst_21 : f32 to vector<8x512xf32>
    %119 = arith.maximumf %117, %118 : vector<8x512xf32>
    %c0_22 = arith.constant 0 : index
    %c0_23 = arith.constant 0 : index
    %120 = vector.load %arg7[%c0_22, %c0_23] : memref<8x9xf32, #tpu.memory_space<vmem>>, vector<8x9xf32>
    %121 = vector.extract_strided_slice %120 {offsets = [0, 4], sizes = [8, 1], strides = [1, 1]} : vector<8x9xf32> to vector<8x1xf32>
    %122 = vector.broadcast %121 : vector<8x1xf32> to vector<8x512xf32>
    %123 = arith.mulf %119, %122 : vector<8x512xf32>
    %c17_i32_24 = arith.constant 17 : i32
    %124 = tpu.dynamic_rotate %119 by %c17_i32_24 dim 1 : vector<8x512xf32>, i32 -> vector<8x512xf32>
    %cst_25 = arith.constant 0.000000e+00 : f32
    %125 = vector.shape_cast %11 : vector<1x512xi1> to vector<1x512xi1>
    %126 = vector.broadcast %125 : vector<1x512xi1> to vector<8x512xi1>
    %127 = vector.broadcast %cst_25 : f32 to vector<8x512xf32>
    %128 = arith.select %126, %124, %127 : vector<8x512xi1>, vector<8x512xf32>
    %129 = vector.extract_strided_slice %120 {offsets = [0, 0], sizes = [8, 1], strides = [1, 1]} : vector<8x9xf32> to vector<8x1xf32>
    %130 = vector.broadcast %129 : vector<8x1xf32> to vector<8x512xf32>
    %131 = arith.mulf %128, %130 : vector<8x512xf32>
    %132 = arith.addf %123, %131 : vector<8x512xf32>
    %c16_i32_26 = arith.constant 16 : i32
    %133 = tpu.dynamic_rotate %119 by %c16_i32_26 dim 1 : vector<8x512xf32>, i32 -> vector<8x512xf32>
    %cst_27 = arith.constant 0.000000e+00 : f32
    %134 = vector.shape_cast %4 : vector<1x512xi1> to vector<1x512xi1>
    %135 = vector.broadcast %134 : vector<1x512xi1> to vector<8x512xi1>
    %136 = vector.broadcast %cst_27 : f32 to vector<8x512xf32>
    %137 = arith.select %135, %133, %136 : vector<8x512xi1>, vector<8x512xf32>
    %138 = vector.extract_strided_slice %120 {offsets = [0, 1], sizes = [8, 1], strides = [1, 1]} : vector<8x9xf32> to vector<8x1xf32>
    %139 = vector.broadcast %138 : vector<8x1xf32> to vector<8x512xf32>
    %140 = arith.mulf %137, %139 : vector<8x512xf32>
    %141 = arith.addf %132, %140 : vector<8x512xf32>
    %c15_i32_28 = arith.constant 15 : i32
    %142 = tpu.dynamic_rotate %119 by %c15_i32_28 dim 1 : vector<8x512xf32>, i32 -> vector<8x512xf32>
    %cst_29 = arith.constant 0.000000e+00 : f32
    %143 = vector.shape_cast %12 : vector<1x512xi1> to vector<1x512xi1>
    %144 = vector.broadcast %143 : vector<1x512xi1> to vector<8x512xi1>
    %145 = vector.broadcast %cst_29 : f32 to vector<8x512xf32>
    %146 = arith.select %144, %142, %145 : vector<8x512xi1>, vector<8x512xf32>
    %147 = vector.extract_strided_slice %120 {offsets = [0, 2], sizes = [8, 1], strides = [1, 1]} : vector<8x9xf32> to vector<8x1xf32>
    %148 = vector.broadcast %147 : vector<8x1xf32> to vector<8x512xf32>
    %149 = arith.mulf %146, %148 : vector<8x512xf32>
    %150 = arith.addf %141, %149 : vector<8x512xf32>
    %c1_i32_30 = arith.constant 1 : i32
    %151 = tpu.dynamic_rotate %119 by %c1_i32_30 dim 1 : vector<8x512xf32>, i32 -> vector<8x512xf32>
    %cst_31 = arith.constant 0.000000e+00 : f32
    %152 = vector.shape_cast %8 : vector<1x512xi1> to vector<1x512xi1>
    %153 = vector.broadcast %152 : vector<1x512xi1> to vector<8x512xi1>
    %154 = vector.broadcast %cst_31 : f32 to vector<8x512xf32>
    %155 = arith.select %153, %151, %154 : vector<8x512xi1>, vector<8x512xf32>
    %156 = vector.extract_strided_slice %120 {offsets = [0, 3], sizes = [8, 1], strides = [1, 1]} : vector<8x9xf32> to vector<8x1xf32>
    %157 = vector.broadcast %156 : vector<8x1xf32> to vector<8x512xf32>
    %158 = arith.mulf %155, %157 : vector<8x512xf32>
    %159 = arith.addf %150, %158 : vector<8x512xf32>
    %c511_i32_32 = arith.constant 511 : i32
    %160 = tpu.dynamic_rotate %119 by %c511_i32_32 dim 1 : vector<8x512xf32>, i32 -> vector<8x512xf32>
    %cst_33 = arith.constant 0.000000e+00 : f32
    %161 = vector.shape_cast %10 : vector<1x512xi1> to vector<1x512xi1>
    %162 = vector.broadcast %161 : vector<1x512xi1> to vector<8x512xi1>
    %163 = vector.broadcast %cst_33 : f32 to vector<8x512xf32>
    %164 = arith.select %162, %160, %163 : vector<8x512xi1>, vector<8x512xf32>
    %165 = vector.extract_strided_slice %120 {offsets = [0, 5], sizes = [8, 1], strides = [1, 1]} : vector<8x9xf32> to vector<8x1xf32>
    %166 = vector.broadcast %165 : vector<8x1xf32> to vector<8x512xf32>
    %167 = arith.mulf %164, %166 : vector<8x512xf32>
    %168 = arith.addf %159, %167 : vector<8x512xf32>
    %c497_i32_34 = arith.constant 497 : i32
    %169 = tpu.dynamic_rotate %119 by %c497_i32_34 dim 1 : vector<8x512xf32>, i32 -> vector<8x512xf32>
    %cst_35 = arith.constant 0.000000e+00 : f32
    %170 = vector.shape_cast %13 : vector<1x512xi1> to vector<1x512xi1>
    %171 = vector.broadcast %170 : vector<1x512xi1> to vector<8x512xi1>
    %172 = vector.broadcast %cst_35 : f32 to vector<8x512xf32>
    %173 = arith.select %171, %169, %172 : vector<8x512xi1>, vector<8x512xf32>
    %174 = vector.extract_strided_slice %120 {offsets = [0, 6], sizes = [8, 1], strides = [1, 1]} : vector<8x9xf32> to vector<8x1xf32>
    %175 = vector.broadcast %174 : vector<8x1xf32> to vector<8x512xf32>
    %176 = arith.mulf %173, %175 : vector<8x512xf32>
    %177 = arith.addf %168, %176 : vector<8x512xf32>
    %c496_i32_36 = arith.constant 496 : i32
    %178 = tpu.dynamic_rotate %119 by %c496_i32_36 dim 1 : vector<8x512xf32>, i32 -> vector<8x512xf32>
    %cst_37 = arith.constant 0.000000e+00 : f32
    %179 = vector.shape_cast %6 : vector<1x512xi1> to vector<1x512xi1>
    %180 = vector.broadcast %179 : vector<1x512xi1> to vector<8x512xi1>
    %181 = vector.broadcast %cst_37 : f32 to vector<8x512xf32>
    %182 = arith.select %180, %178, %181 : vector<8x512xi1>, vector<8x512xf32>
    %183 = vector.extract_strided_slice %120 {offsets = [0, 7], sizes = [8, 1], strides = [1, 1]} : vector<8x9xf32> to vector<8x1xf32>
    %184 = vector.broadcast %183 : vector<8x1xf32> to vector<8x512xf32>
    %185 = arith.mulf %182, %184 : vector<8x512xf32>
    %186 = arith.addf %177, %185 : vector<8x512xf32>
    %c495_i32_38 = arith.constant 495 : i32
    %187 = tpu.dynamic_rotate %119 by %c495_i32_38 dim 1 : vector<8x512xf32>, i32 -> vector<8x512xf32>
    %cst_39 = arith.constant 0.000000e+00 : f32
    %188 = vector.shape_cast %14 : vector<1x512xi1> to vector<1x512xi1>
    %189 = vector.broadcast %188 : vector<1x512xi1> to vector<8x512xi1>
    %190 = vector.broadcast %cst_39 : f32 to vector<8x512xf32>
    %191 = arith.select %189, %187, %190 : vector<8x512xi1>, vector<8x512xf32>
    %192 = vector.extract_strided_slice %120 {offsets = [0, 8], sizes = [8, 1], strides = [1, 1]} : vector<8x9xf32> to vector<8x1xf32>
    %193 = vector.broadcast %192 : vector<8x1xf32> to vector<8x512xf32>
    %194 = arith.mulf %191, %193 : vector<8x512xf32>
    %195 = arith.addf %186, %194 : vector<8x512xf32>
    %c0_40 = arith.constant 0 : index
    %c0_41 = arith.constant 0 : index
    %196 = vector.load %arg8[%c0_40, %c0_41] : memref<8x8xf32, #tpu.memory_space<vmem>>, vector<8x8xf32>
    %197 = vector.extract_strided_slice %195 {offsets = [0, 0], sizes = [1, 512], strides = [1, 1]} : vector<8x512xf32> to vector<1x512xf32>
    %198 = vector.extract_strided_slice %196 {offsets = [0, 0], sizes = [8, 1], strides = [1, 1]} : vector<8x8xf32> to vector<8x1xf32>
    %199 = vector.broadcast %197 : vector<1x512xf32> to vector<8x512xf32>
    %200 = vector.broadcast %198 : vector<8x1xf32> to vector<8x512xf32>
    %201 = arith.mulf %199, %200 : vector<8x512xf32>
    %202 = vector.extract_strided_slice %195 {offsets = [1, 0], sizes = [1, 512], strides = [1, 1]} : vector<8x512xf32> to vector<1x512xf32>
    %203 = vector.extract_strided_slice %196 {offsets = [0, 1], sizes = [8, 1], strides = [1, 1]} : vector<8x8xf32> to vector<8x1xf32>
    %204 = vector.broadcast %202 : vector<1x512xf32> to vector<8x512xf32>
    %205 = vector.broadcast %203 : vector<8x1xf32> to vector<8x512xf32>
    %206 = arith.mulf %204, %205 : vector<8x512xf32>
    %207 = arith.addf %201, %206 : vector<8x512xf32>
    %208 = vector.extract_strided_slice %195 {offsets = [2, 0], sizes = [1, 512], strides = [1, 1]} : vector<8x512xf32> to vector<1x512xf32>
    %209 = vector.extract_strided_slice %196 {offsets = [0, 2], sizes = [8, 1], strides = [1, 1]} : vector<8x8xf32> to vector<8x1xf32>
    %210 = vector.broadcast %208 : vector<1x512xf32> to vector<8x512xf32>
    %211 = vector.broadcast %209 : vector<8x1xf32> to vector<8x512xf32>
    %212 = arith.mulf %210, %211 : vector<8x512xf32>
    %213 = arith.addf %207, %212 : vector<8x512xf32>
    %214 = vector.extract_strided_slice %195 {offsets = [3, 0], sizes = [1, 512], strides = [1, 1]} : vector<8x512xf32> to vector<1x512xf32>
    %215 = vector.extract_strided_slice %196 {offsets = [0, 3], sizes = [8, 1], strides = [1, 1]} : vector<8x8xf32> to vector<8x1xf32>
    %216 = vector.broadcast %214 : vector<1x512xf32> to vector<8x512xf32>
    %217 = vector.broadcast %215 : vector<8x1xf32> to vector<8x512xf32>
    %218 = arith.mulf %216, %217 : vector<8x512xf32>
    %219 = arith.addf %213, %218 : vector<8x512xf32>
    %220 = vector.extract_strided_slice %195 {offsets = [4, 0], sizes = [1, 512], strides = [1, 1]} : vector<8x512xf32> to vector<1x512xf32>
    %221 = vector.extract_strided_slice %196 {offsets = [0, 4], sizes = [8, 1], strides = [1, 1]} : vector<8x8xf32> to vector<8x1xf32>
    %222 = vector.broadcast %220 : vector<1x512xf32> to vector<8x512xf32>
    %223 = vector.broadcast %221 : vector<8x1xf32> to vector<8x512xf32>
    %224 = arith.mulf %222, %223 : vector<8x512xf32>
    %225 = arith.addf %219, %224 : vector<8x512xf32>
    %226 = vector.extract_strided_slice %195 {offsets = [5, 0], sizes = [1, 512], strides = [1, 1]} : vector<8x512xf32> to vector<1x512xf32>
    %227 = vector.extract_strided_slice %196 {offsets = [0, 5], sizes = [8, 1], strides = [1, 1]} : vector<8x8xf32> to vector<8x1xf32>
    %228 = vector.broadcast %226 : vector<1x512xf32> to vector<8x512xf32>
    %229 = vector.broadcast %227 : vector<8x1xf32> to vector<8x512xf32>
    %230 = arith.mulf %228, %229 : vector<8x512xf32>
    %231 = arith.addf %225, %230 : vector<8x512xf32>
    %232 = vector.extract_strided_slice %195 {offsets = [6, 0], sizes = [1, 512], strides = [1, 1]} : vector<8x512xf32> to vector<1x512xf32>
    %233 = vector.extract_strided_slice %196 {offsets = [0, 6], sizes = [8, 1], strides = [1, 1]} : vector<8x8xf32> to vector<8x1xf32>
    %234 = vector.broadcast %232 : vector<1x512xf32> to vector<8x512xf32>
    %235 = vector.broadcast %233 : vector<8x1xf32> to vector<8x512xf32>
    %236 = arith.mulf %234, %235 : vector<8x512xf32>
    %237 = arith.addf %231, %236 : vector<8x512xf32>
    %238 = vector.extract_strided_slice %195 {offsets = [7, 0], sizes = [1, 512], strides = [1, 1]} : vector<8x512xf32> to vector<1x512xf32>
    %239 = vector.extract_strided_slice %196 {offsets = [0, 7], sizes = [8, 1], strides = [1, 1]} : vector<8x8xf32> to vector<8x1xf32>
    %240 = vector.broadcast %238 : vector<1x512xf32> to vector<8x512xf32>
    %241 = vector.broadcast %239 : vector<8x1xf32> to vector<8x512xf32>
    %242 = arith.mulf %240, %241 : vector<8x512xf32>
    %243 = arith.addf %237, %242 : vector<8x512xf32>
    %c0_42 = arith.constant 0 : index
    %c0_43 = arith.constant 0 : index
    %244 = vector.load %arg9[%c0_42, %c0_43] : memref<8x1xf32, #tpu.memory_space<vmem>>, vector<8x1xf32>
    %245 = vector.broadcast %244 : vector<8x1xf32> to vector<8x512xf32>
    %246 = arith.addf %243, %245 : vector<8x512xf32>
    %cst_44 = arith.constant 0.000000e+00 : f32
    %247 = vector.broadcast %cst_44 : f32 to vector<8x512xf32>
    %248 = arith.maximumf %246, %247 : vector<8x512xf32>
    %c0_45 = arith.constant 0 : index
    %c0_46 = arith.constant 0 : index
    %249 = vector.load %arg10[%c0_45, %c0_46] : memref<8x4xf32, #tpu.memory_space<vmem>>, vector<8x4xf32>
    %250 = vector.extract_strided_slice %0 {offsets = [0, 0], sizes = [1, 512], strides = [1, 1]} : vector<4x512xf32> to vector<1x512xf32>
    %251 = vector.extract_strided_slice %249 {offsets = [0, 0], sizes = [8, 1], strides = [1, 1]} : vector<8x4xf32> to vector<8x1xf32>
    %252 = vector.broadcast %250 : vector<1x512xf32> to vector<8x512xf32>
    %253 = vector.broadcast %251 : vector<8x1xf32> to vector<8x512xf32>
    %254 = arith.mulf %252, %253 : vector<8x512xf32>
    %255 = vector.extract_strided_slice %0 {offsets = [1, 0], sizes = [1, 512], strides = [1, 1]} : vector<4x512xf32> to vector<1x512xf32>
    %256 = vector.extract_strided_slice %249 {offsets = [0, 1], sizes = [8, 1], strides = [1, 1]} : vector<8x4xf32> to vector<8x1xf32>
    %257 = vector.broadcast %255 : vector<1x512xf32> to vector<8x512xf32>
    %258 = vector.broadcast %256 : vector<8x1xf32> to vector<8x512xf32>
    %259 = arith.mulf %257, %258 : vector<8x512xf32>
    %260 = arith.addf %254, %259 : vector<8x512xf32>
    %261 = vector.extract_strided_slice %0 {offsets = [2, 0], sizes = [1, 512], strides = [1, 1]} : vector<4x512xf32> to vector<1x512xf32>
    %262 = vector.extract_strided_slice %249 {offsets = [0, 2], sizes = [8, 1], strides = [1, 1]} : vector<8x4xf32> to vector<8x1xf32>
    %263 = vector.broadcast %261 : vector<1x512xf32> to vector<8x512xf32>
    %264 = vector.broadcast %262 : vector<8x1xf32> to vector<8x512xf32>
    %265 = arith.mulf %263, %264 : vector<8x512xf32>
    %266 = arith.addf %260, %265 : vector<8x512xf32>
    %267 = vector.extract_strided_slice %0 {offsets = [3, 0], sizes = [1, 512], strides = [1, 1]} : vector<4x512xf32> to vector<1x512xf32>
    %268 = vector.extract_strided_slice %249 {offsets = [0, 3], sizes = [8, 1], strides = [1, 1]} : vector<8x4xf32> to vector<8x1xf32>
    %269 = vector.broadcast %267 : vector<1x512xf32> to vector<8x512xf32>
    %270 = vector.broadcast %268 : vector<8x1xf32> to vector<8x512xf32>
    %271 = arith.mulf %269, %270 : vector<8x512xf32>
    %272 = arith.addf %266, %271 : vector<8x512xf32>
    %c0_47 = arith.constant 0 : index
    %c0_48 = arith.constant 0 : index
    %273 = vector.load %arg11[%c0_47, %c0_48] : memref<8x1xf32, #tpu.memory_space<vmem>>, vector<8x1xf32>
    %274 = vector.broadcast %273 : vector<8x1xf32> to vector<8x512xf32>
    %275 = arith.addf %272, %274 : vector<8x512xf32>
    %276 = arith.addf %248, %275 : vector<8x512xf32>
    %cst_49 = arith.constant 0.000000e+00 : f32
    %277 = vector.broadcast %cst_49 : f32 to vector<8x512xf32>
    %278 = arith.maximumf %276, %277 : vector<8x512xf32>
    %c0_50 = arith.constant 0 : index
    %c0_51 = arith.constant 0 : index
    %279 = vector.load %arg12[%c0_50, %c0_51] : memref<8x512xf32, #tpu.memory_space<vmem>>, vector<8x512xf32>
    tpu.vector_store %arg12[%c0_50, %c0_51], %278 {strides = array<i32>} : memref<8x512xf32, #tpu.memory_space<vmem>>, vector<8x512xf32>,
    return
  }
  func.func @transform_0(%arg0: i32) -> (i32, i32) {
    %c0_i32 = arith.constant 0 : i32
    %c0_i32_0 = arith.constant 0 : i32
    return %c0_i32, %arg0 : i32, i32
  }
  func.func @transform_1(%arg0: i32) -> (i32, i32) {
    %c0_i32 = arith.constant 0 : i32
    %c0_i32_0 = arith.constant 0 : i32
    %c0_i32_1 = arith.constant 0 : i32
    return %c0_i32, %c0_i32_0 : i32, i32
  }
  func.func @transform_2(%arg0: i32) -> (i32, i32) {
    %c0_i32 = arith.constant 0 : i32
    %c0_i32_0 = arith.constant 0 : i32
    %c0_i32_1 = arith.constant 0 : i32
    return %c0_i32, %c0_i32_0 : i32, i32
  }
  func.func @transform_3(%arg0: i32) -> (i32, i32) {
    %c0_i32 = arith.constant 0 : i32
    %c0_i32_0 = arith.constant 0 : i32
    %c0_i32_1 = arith.constant 0 : i32
    return %c0_i32, %c0_i32_0 : i32, i32
  }
  func.func @transform_4(%arg0: i32) -> (i32, i32) {
    %c0_i32 = arith.constant 0 : i32
    %c0_i32_0 = arith.constant 0 : i32
    %c0_i32_1 = arith.constant 0 : i32
    return %c0_i32, %c0_i32_0 : i32, i32
  }
  func.func @transform_5(%arg0: i32) -> (i32, i32) {
    %c0_i32 = arith.constant 0 : i32
    %c0_i32_0 = arith.constant 0 : i32
    %c0_i32_1 = arith.constant 0 : i32
    return %c0_i32, %c0_i32_0 : i32, i32
  }
  func.func @transform_6(%arg0: i32) -> (i32, i32) {
    %c0_i32 = arith.constant 0 : i32
    %c0_i32_0 = arith.constant 0 : i32
    %c0_i32_1 = arith.constant 0 : i32
    return %c0_i32, %c0_i32_0 : i32, i32
  }
  func.func @transform_7(%arg0: i32) -> (i32, i32) {
    %c0_i32 = arith.constant 0 : i32
    %c0_i32_0 = arith.constant 0 : i32
    %c0_i32_1 = arith.constant 0 : i32
    return %c0_i32, %c0_i32_0 : i32, i32
  }
  func.func @transform_8(%arg0: i32) -> (i32, i32) {
    %c0_i32 = arith.constant 0 : i32
    %c0_i32_0 = arith.constant 0 : i32
    %c0_i32_1 = arith.constant 0 : i32
    return %c0_i32, %c0_i32_0 : i32, i32
  }
  func.func @transform_9(%arg0: i32) -> (i32, i32) {
    %c0_i32 = arith.constant 0 : i32
    %c0_i32_0 = arith.constant 0 : i32
    %c0_i32_1 = arith.constant 0 : i32
    return %c0_i32, %c0_i32_0 : i32, i32
  }
  func.func @transform_10(%arg0: i32) -> (i32, i32) {
    %c0_i32 = arith.constant 0 : i32
    %c0_i32_0 = arith.constant 0 : i32
    %c0_i32_1 = arith.constant 0 : i32
    return %c0_i32, %c0_i32_0 : i32, i32
  }
  func.func @transform_11(%arg0: i32) -> (i32, i32) {
    %c0_i32 = arith.constant 0 : i32
    %c0_i32_0 = arith.constant 0 : i32
    return %c0_i32, %arg0 : i32, i32
  }
}

</mosaic_0001>

<llo_original>
// kernel: tpu_custom_call.1
$region0: #{tpu_custom_call.1}
  #allocation0 [shape = 'u32[]', space=smem, size = 0x4, offset = 0x4, fixed_abs, tag = 'smem constant byte address 0x4 - core index']
  #allocation1 [shape = 'u32[72,128]{1,0:T(1,128)}', space=vmem, size = 0x9000, scoped, tag = 'internal scratch']
  %s0 = inlined_call_operand.vmem [shape: f32[4,512], index: 0, kind: input, shape index: {}]
  %s1 = inlined_call_operand.vmem [shape: s32[1,512], index: 1, kind: input, shape index: {}]
  %s2 = inlined_call_operand.vmem [shape: s32[1,512], index: 2, kind: input, shape index: {}]
  %s3 = inlined_call_operand.vmem [shape: f32[4,9], index: 3, kind: input, shape index: {}]
  %s4 = inlined_call_operand.vmem [shape: f32[8,4], index: 4, kind: input, shape index: {}]
  %s5 = inlined_call_operand.vmem [shape: f32[8,1], index: 5, kind: input, shape index: {}]
  %s6 = inlined_call_operand.vmem [shape: f32[8,9], index: 6, kind: input, shape index: {}]
  %s7 = inlined_call_operand.vmem [shape: f32[8,8], index: 7, kind: input, shape index: {}]
  %s8 = inlined_call_operand.vmem [shape: f32[8,1], index: 8, kind: input, shape index: {}]
  %s9 = inlined_call_operand.vmem [shape: f32[8,4], index: 9, kind: input, shape index: {}]
  %s10 = inlined_call_operand.vmem [shape: f32[8,1], index: 10, kind: input, shape index: {}]
  %s11 = inlined_call_operand.hbm [shape: f32[8,512], index: 11, kind: output, shape index: {}]
  %s12 = sld [smem:[#allocation0]]
  $region54: #{tpu_custom_call.1} parent=0
    _
  %s14 = ssub.s32 1, %s12
  %s15 = scalar_select 0, %s14, %s12
  $region1: #{tpu_custom_call.1} parent=0
    #allocation2 [shape = 'u8[16384]{0}', space=vmem, size = 0x4000, scoped, tag = 'output window, operand 0, single buffered']
    #allocation3 [shape = 's32[1]{0}', space=sflag, size = 0x4, scoped, tag = 'scoped memory for tpu_custom_call.1']
    %16 = vsyncpa [#allocation3], 0
    // Predicated region
    $region2: #{tpu_custom_call.1} parent=1 // pred_check
      _
    $region3: #{tpu_custom_call.1} parent=1 // pred_check_branch
      %18 = sbr.rel (0) target = $region5
    $region4: #{tpu_custom_call.1} parent=1 // pred_region
      _
    $region5: #{tpu_custom_call.1} parent=1 // pred_fallthru
      _
    // Predicated region
    $region6: #{tpu_custom_call.1} parent=1 // pred_check
      _
    $region7: #{tpu_custom_call.1} parent=1 // pred_check_branch
      %20 = sbr.rel (0) target = $region9
    $region8: #{tpu_custom_call.1} parent=1 // pred_region
      _
    $region9: #{tpu_custom_call.1} parent=1 // pred_fallthru
      _
    // Predicated region
    $region10: #{tpu_custom_call.1} parent=1 // pred_check
      _
    $region11: #{tpu_custom_call.1} parent=1 // pred_check_branch
      %22 = sbr.rel (0) target = $region13
    $region12: #{tpu_custom_call.1} parent=1 // pred_region
      _
    $region13: #{tpu_custom_call.1} parent=1 // pred_fallthru
      _
    // Predicated region
    $region14: #{tpu_custom_call.1} parent=1 // pred_check
      _
    $region15: #{tpu_custom_call.1} parent=1 // pred_check_branch
      %24 = sbr.rel (0) target = $region17
    $region16: #{tpu_custom_call.1} parent=1 // pred_region
      _
    $region17: #{tpu_custom_call.1} parent=1 // pred_fallthru
      _
    // Predicated region
    $region18: #{tpu_custom_call.1} parent=1 // pred_check
      _
    $region19: #{tpu_custom_call.1} parent=1 // pred_check_branch
      %26 = sbr.rel (0) target = $region21
    $region20: #{tpu_custom_call.1} parent=1 // pred_region
      _
    $region21: #{tpu_custom_call.1} parent=1 // pred_fallthru
      _
    // Predicated region
    $region22: #{tpu_custom_call.1} parent=1 // pred_check
      _
    $region23: #{tpu_custom_call.1} parent=1 // pred_check_branch
      %28 = sbr.rel (0) target = $region25
    $region24: #{tpu_custom_call.1} parent=1 // pred_region
      _
    $region25: #{tpu_custom_call.1} parent=1 // pred_fallthru
      _
    // Predicated region
    $region26: #{tpu_custom_call.1} parent=1 // pred_check
      _
    $region27: #{tpu_custom_call.1} parent=1 // pred_check_branch
      %30 = sbr.rel (0) target = $region29
    $region28: #{tpu_custom_call.1} parent=1 // pred_region
      _
    $region29: #{tpu_custom_call.1} parent=1 // pred_fallthru
      _
    // Predicated region
    $region30: #{tpu_custom_call.1} parent=1 // pred_check
      _
    $region31: #{tpu_custom_call.1} parent=1 // pred_check_branch
      %32 = sbr.rel (0) target = $region33
    $region32: #{tpu_custom_call.1} parent=1 // pred_region
      _
    $region33: #{tpu_custom_call.1} parent=1 // pred_fallthru
      _
    // Predicated region
    $region34: #{tpu_custom_call.1} parent=1 // pred_check
      _
    $region35: #{tpu_custom_call.1} parent=1 // pred_check_branch
      %34 = sbr.rel (0) target = $region37
    $region36: #{tpu_custom_call.1} parent=1 // pred_region
      _
    $region37: #{tpu_custom_call.1} parent=1 // pred_fallthru
      _
    // Predicated region
    $region38: #{tpu_custom_call.1} parent=1 // pred_check
      _
    $region39: #{tpu_custom_call.1} parent=1 // pred_check_branch
      %36 = sbr.rel (0) target = $region41
    $region40: #{tpu_custom_call.1} parent=1 // pred_region
      _
    $region41: #{tpu_custom_call.1} parent=1 // pred_fallthru
      _
    // Predicated region
    $region42: #{tpu_custom_call.1} parent=1 // pred_check
      _
    $region43: #{tpu_custom_call.1} parent=1 // pred_check_branch
      %38 = sbr.rel (0) target = $region45
    $region44: #{tpu_custom_call.1} parent=1 // pred_region
      _
    $region45: #{tpu_custom_call.1} parent=1 // pred_fallthru
      _
    %v39 = vld [vmem:[%s0] sm:$0xff]
    %v40 = vld [vmem:[%s0 + $0x8] sm:$0xff]
    %v41 = vld [vmem:[%s1] sm:$0xf]
    %v42 = vld [vmem:[%s2] sm:$0xf]
    %vm43 = vcmp.ge.s32.totalorder %v41, 1
    %vm44 = vcmp.le.s32.totalorder %v41, 14
    %vm45 = vcmp.ge.s32.totalorder %v42, 1
    %vm46 = vcmp.le.s32.totalorder %v42, 14
    %vm47 = vmand %vm43, %vm45
    %vm48 = vmand %vm43, %vm46
    %vm49 = vmand %vm44, %vm45
    %vm50 = vmand %vm44, %vm46
    %v51 = vld [vmem:[%s3] sm:$0xf]
    %53 = vset.pattern.permute.xlu0 4
    %54 = vperm.xlu0 %53, %v51
    %v55 = vpop.permute.xlu0 %54
    %v57 = vunpack.c.l.s4 839922192
    %v58 = vunpack.c.0.s8 %v57
    %v59 = vperm.slane %v55, %v58
    %v61 = vmul.f32 %v39, %v59
    %v62 = vmul.f32 %v40, %v59
    %65 = vst [vmem:[#allocation1] ss:$2 sm:$0xff] %v39
    %s66 = scalar_lea.vmem [#allocation1], 16
    %67 = vst [vmem:[%s66] ss:$2 sm:$0xff] %v40
    %v68 = vld.sshfl [vmem:[#allocation1] sm:$0xff pattern:$0x75316420]
    %v69 = vld.sshfl [vmem:[#allocation1 + $0x8] sm:$0xff pattern:$0x75316420]
    %v70 = vld.sshfl [vmem:[#allocation1 + $0x10] sm:$0xff pattern:$0x75316420]
    %v71 = vld.sshfl [vmem:[#allocation1 + $0x18] sm:$0xff pattern:$0x75316420]
    %76 = vrot.lane.b32.xlu0 %v68, 17
    %v77 = vpop.permute.xlu0 %76
    %78 = vrot.lane.b32.xlu0 %v69, 17
    %v79 = vpop.permute.xlu0 %78
    %80 = vrot.lane.b32.xlu0 %v70, 17
    %v81 = vpop.permute.xlu0 %80
    %82 = vrot.lane.b32.xlu0 %v71, 17
    %v83 = vpop.permute.xlu0 %82
    %v84 = vlaneseq
    %v85 = vand.u32 %v84, 127
    %vm86 = vcmp.lt.s32.totalorder %v85, 17
    %v87 = vsel %vm86, %v81, %v83
    %v88 = vsel %vm86, %v79, %v81
    %v89 = vsel %vm86, %v77, %v79
    %v90 = vsel %vm86, %v83, %v77
    %v91 = vsel %vm47, 1, 0
    %v92 = vperm.slane %v91, 0
    %v93 = vperm.slane %v91, 1
    %v94 = vperm.slane %v91, 2
    %v95 = vperm.slane %v91, 3
    %vm96 = vcmp.eq.s32.totalorder %v92, 1
    %vm97 = vcmp.eq.s32.totalorder %v93, 1
    %vm98 = vcmp.eq.s32.totalorder %v94, 1
    %vm99 = vcmp.eq.s32.totalorder %v95, 1
    %v100 = vsel %vm96, %v90, 0.0
    %v101 = vsel %vm97, %v89, 0.0
    %v102 = vsel %vm98, %v88, 0.0
    %v103 = vsel %vm99, %v87, 0.0
    %104 = vset.pattern.permute.xlu0 0
    %105 = vperm.xlu0 %104, %v51
    %v106 = vpop.permute.xlu0 %105
    %v108 = vmul.f32 %v100, %v106
    %v109 = vmul.f32 %v101, %v106
    %v110 = vmul.f32 %v102, %v106
    %v111 = vmul.f32 %v103, %v106
    %v116 = vrot.slane %v109, 4
    %v117 = vrot.slane %v111, 4
    %vm118 = vcmask 1043456
    %v119 = vsel %vm118, %v108, %v116
    %v120 = vsel %vm118, %v110, %v117
    %v123 = vadd.f32 %v61, %v119
    %v124 = vadd.f32 %v62, %v120
    %125 = vst [vmem:[#allocation1] ss:$2 sm:$0xff] %v39
    %s126 = scalar_lea.vmem [#allocation1], 16
    %127 = vst [vmem:[%s126] ss:$2 sm:$0xff] %v40
    %v128 = vld.sshfl [vmem:[#allocation1] sm:$0xff pattern:$0x75316420]
    %v129 = vld.sshfl [vmem:[#allocation1 + $0x8] sm:$0xff pattern:$0x75316420]
    %v130 = vld.sshfl [vmem:[#allocation1 + $0x10] sm:$0xff pattern:$0x75316420]
    %v131 = vld.sshfl [vmem:[#allocation1 + $0x18] sm:$0xff pattern:$0x75316420]
    %136 = vrot.lane.b32.xlu0 %v128, 16
    %v137 = vpop.permute.xlu0 %136
    %138 = vrot.lane.b32.xlu0 %v129, 16
    %v139 = vpop.permute.xlu0 %138
    %140 = vrot.lane.b32.xlu0 %v130, 16
    %v141 = vpop.permute.xlu0 %140
    %142 = vrot.lane.b32.xlu0 %v131, 16
    %v143 = vpop.permute.xlu0 %142
    %vm144 = vcmp.lt.s32.totalorder %v85, 16
    %v145 = vsel %vm144, %v141, %v143
    %v146 = vsel %vm144, %v139, %v141
    %v147 = vsel %vm144, %v137, %v139
    %v148 = vsel %vm144, %v143, %v137
    %v149 = vsel %vm43, 1, 0
    %v150 = vperm.slane %v149, 0
    %v151 = vperm.slane %v149, 1
    %v152 = vperm.slane %v149, 2
    %v153 = vperm.slane %v149, 3
    %vm154 = vcmp.eq.s32.totalorder %v150, 1
    %vm155 = vcmp.eq.s32.totalorder %v151, 1
    %vm156 = vcmp.eq.s32.totalorder %v152, 1
    %vm157 = vcmp.eq.s32.totalorder %v153, 1
    %v158 = vsel %vm154, %v148, 0.0
    %v159 = vsel %vm155, %v147, 0.0
    %v160 = vsel %vm156, %v146, 0.0
    %v161 = vsel %vm157, %v145, 0.0
    %162 = vset.pattern.permute.xlu0 1
    %163 = vperm.xlu0 %162, %v51
    %v164 = vpop.permute.xlu0 %163
    %v166 = vmul.f32 %v158, %v164
    %v167 = vmul.f32 %v159, %v164
    %v168 = vmul.f32 %v160, %v164
    %v169 = vmul.f32 %v161, %v164
    %v174 = vrot.slane %v167, 4
    %v175 = vrot.slane %v169, 4
    %v176 = vsel %vm118, %v166, %v174
    %v177 = vsel %vm118, %v168, %v175
    %v180 = vadd.f32 %v123, %v176
    %v181 = vadd.f32 %v124, %v177
    %182 = vst [vmem:[#allocation1] ss:$2 sm:$0xff] %v39
    %s183 = scalar_lea.vmem [#allocation1], 16
    %184 = vst [vmem:[%s183] ss:$2 sm:$0xff] %v40
    %v185 = vld.sshfl [vmem:[#allocation1] sm:$0xff pattern:$0x75316420]
    %v186 = vld.sshfl [vmem:[#allocation1 + $0x8] sm:$0xff pattern:$0x75316420]
    %v187 = vld.sshfl [vmem:[#allocation1 + $0x10] sm:$0xff pattern:$0x75316420]
    %v188 = vld.sshfl [vmem:[#allocation1 + $0x18] sm:$0xff pattern:$0x75316420]
    %193 = vrot.lane.b32.xlu0 %v185, 15
    %v194 = vpop.permute.xlu0 %193
    %195 = vrot.lane.b32.xlu0 %v186, 15
    %v196 = vpop.permute.xlu0 %195
    %197 = vrot.lane.b32.xlu0 %v187, 15
    %v198 = vpop.permute.xlu0 %197
    %199 = vrot.lane.b32.xlu0 %v188, 15
    %v200 = vpop.permute.xlu0 %199
    %vm201 = vcmp.lt.s32.totalorder %v85, 15
    %v202 = vsel %vm201, %v198, %v200
    %v203 = vsel %vm201, %v196, %v198
    %v204 = vsel %vm201, %v194, %v196
    %v205 = vsel %vm201, %v200, %v194
    %v206 = vsel %vm48, 1, 0
    %v207 = vperm.slane %v206, 0
    %v208 = vperm.slane %v206, 1
    %v209 = vperm.slane %v206, 2
    %v210 = vperm.slane %v206, 3
    %vm211 = vcmp.eq.s32.totalorder %v207, 1
    %vm212 = vcmp.eq.s32.totalorder %v208, 1
    %vm213 = vcmp.eq.s32.totalorder %v209, 1
    %vm214 = vcmp.eq.s32.totalorder %v210, 1
    %v215 = vsel %vm211, %v205, 0.0
    %v216 = vsel %vm212, %v204, 0.0
    %v217 = vsel %vm213, %v203, 0.0
    %v218 = vsel %vm214, %v202, 0.0
    %219 = vset.pattern.permute.xlu0 2
    %220 = vperm.xlu0 %219, %v51
    %v221 = vpop.permute.xlu0 %220
    %v223 = vmul.f32 %v215, %v221
    %v224 = vmul.f32 %v216, %v221
    %v225 = vmul.f32 %v217, %v221
    %v226 = vmul.f32 %v218, %v221
    %v231 = vrot.slane %v224, 4
    %v232 = vrot.slane %v226, 4
    %v233 = vsel %vm118, %v223, %v231
    %v234 = vsel %vm118, %v225, %v232
    %v237 = vadd.f32 %v180, %v233
    %v238 = vadd.f32 %v181, %v234
    %239 = vst [vmem:[#allocation1] ss:$2 sm:$0xff] %v39
    %s240 = scalar_lea.vmem [#allocation1], 16
    %241 = vst [vmem:[%s240] ss:$2 sm:$0xff] %v40
    %v242 = vld.sshfl [vmem:[#allocation1] sm:$0xff pattern:$0x75316420]
    %v243 = vld.sshfl [vmem:[#allocation1 + $0x8] sm:$0xff pattern:$0x75316420]
    %v244 = vld.sshfl [vmem:[#allocation1 + $0x10] sm:$0xff pattern:$0x75316420]
    %v245 = vld.sshfl [vmem:[#allocation1 + $0x18] sm:$0xff pattern:$0x75316420]
    %250 = vrot.lane.b32.xlu0 %v242, 1
    %v251 = vpop.permute.xlu0 %250
    %252 = vrot.lane.b32.xlu0 %v243, 1
    %v253 = vpop.permute.xlu0 %252
    %254 = vrot.lane.b32.xlu0 %v244, 1
    %v255 = vpop.permute.xlu0 %254
    %256 = vrot.lane.b32.xlu0 %v245, 1
    %v257 = vpop.permute.xlu0 %256
    %vm258 = vcmp.lt.s32.totalorder %v85, 1
    %v259 = vsel %vm258, %v255, %v257
    %v260 = vsel %vm258, %v253, %v255
    %v261 = vsel %vm258, %v251, %v253
    %v262 = vsel %vm258, %v257, %v251
    %v263 = vsel %vm45, 1, 0
    %v264 = vperm.slane %v263, 0
    %v265 = vperm.slane %v263, 1
    %v266 = vperm.slane %v263, 2
    %v267 = vperm.slane %v263, 3
    %vm268 = vcmp.eq.s32.totalorder %v264, 1
    %vm269 = vcmp.eq.s32.totalorder %v265, 1
    %vm270 = vcmp.eq.s32.totalorder %v266, 1
    %vm271 = vcmp.eq.s32.totalorder %v267, 1
    %v272 = vsel %vm268, %v262, 0.0
    %v273 = vsel %vm269, %v261, 0.0
    %v274 = vsel %vm270, %v260, 0.0
    %v275 = vsel %vm271, %v259, 0.0
    %276 = vset.pattern.permute.xlu0 3
    %277 = vperm.xlu0 %276, %v51
    %v278 = vpop.permute.xlu0 %277
    %v280 = vmul.f32 %v272, %v278
    %v281 = vmul.f32 %v273, %v278
    %v282 = vmul.f32 %v274, %v278
    %v283 = vmul.f32 %v275, %v278
    %v288 = vrot.slane %v281, 4
    %v289 = vrot.slane %v283, 4
    %v290 = vsel %vm118, %v280, %v288
    %v291 = vsel %vm118, %v282, %v289
    %v294 = vadd.f32 %v237, %v290
    %v295 = vadd.f32 %v238, %v291
    %296 = vst [vmem:[#allocation1] ss:$2 sm:$0xff] %v39
    %s297 = scalar_lea.vmem [#allocation1], 16
    %298 = vst [vmem:[%s297] ss:$2 sm:$0xff] %v40
    %v299 = vld.sshfl [vmem:[#allocation1] sm:$0xff pattern:$0x75316420]
    %v300 = vld.sshfl [vmem:[#allocation1 + $0x8] sm:$0xff pattern:$0x75316420]
    %v301 = vld.sshfl [vmem:[#allocation1 + $0x10] sm:$0xff pattern:$0x75316420]
    %v302 = vld.sshfl [vmem:[#allocation1 + $0x18] sm:$0xff pattern:$0x75316420]
    %307 = vrot.lane.b32.xlu0 %v299, 127
    %v308 = vpop.permute.xlu0 %307
    %309 = vrot.lane.b32.xlu0 %v300, 127
    %v310 = vpop.permute.xlu0 %309
    %311 = vrot.lane.b32.xlu0 %v301, 127
    %v312 = vpop.permute.xlu0 %311
    %313 = vrot.lane.b32.xlu0 %v302, 127
    %v314 = vpop.permute.xlu0 %313
    %vm315 = vcmp.lt.s32.totalorder %v85, 127
    %v316 = vsel %vm315, %v312, %v314
    %v317 = vsel %vm315, %v310, %v312
    %v318 = vsel %vm315, %v308, %v310
    %v319 = vsel %vm315, %v314, %v308
    %v320 = vsel %vm46, 1, 0
    %v321 = vperm.slane %v320, 0
    %v322 = vperm.slane %v320, 1
    %v323 = vperm.slane %v320, 2
    %v324 = vperm.slane %v320, 3
    %vm325 = vcmp.eq.s32.totalorder %v321, 1
    %vm326 = vcmp.eq.s32.totalorder %v322, 1
    %vm327 = vcmp.eq.s32.totalorder %v323, 1
    %vm328 = vcmp.eq.s32.totalorder %v324, 1
    %v329 = vsel %vm325, %v318, 0.0
    %v330 = vsel %vm326, %v317, 0.0
    %v331 = vsel %vm327, %v316, 0.0
    %v332 = vsel %vm328, %v319, 0.0
    %333 = vset.pattern.permute.xlu0 5
    %334 = vperm.xlu0 %333, %v51
    %v335 = vpop.permute.xlu0 %334
    %v337 = vmul.f32 %v329, %v335
    %v338 = vmul.f32 %v330, %v335
    %v339 = vmul.f32 %v331, %v335
    %v340 = vmul.f32 %v332, %v335
    %v345 = vrot.slane %v338, 4
    %v346 = vrot.slane %v340, 4
    %v347 = vsel %vm118, %v337, %v345
    %v348 = vsel %vm118, %v339, %v346
    %v351 = vadd.f32 %v294, %v347
    %v352 = vadd.f32 %v295, %v348
    %353 = vst [vmem:[#allocation1] ss:$2 sm:$0xff] %v39
    %s354 = scalar_lea.vmem [#allocation1], 16
    %355 = vst [vmem:[%s354] ss:$2 sm:$0xff] %v40
    %v356 = vld.sshfl [vmem:[#allocation1] sm:$0xff pattern:$0x75316420]
    %v357 = vld.sshfl [vmem:[#allocation1 + $0x8] sm:$0xff pattern:$0x75316420]
    %v358 = vld.sshfl [vmem:[#allocation1 + $0x10] sm:$0xff pattern:$0x75316420]
    %v359 = vld.sshfl [vmem:[#allocation1 + $0x18] sm:$0xff pattern:$0x75316420]
    %364 = vrot.lane.b32.xlu0 %v356, 113
    %v365 = vpop.permute.xlu0 %364
    %366 = vrot.lane.b32.xlu0 %v357, 113
    %v367 = vpop.permute.xlu0 %366
    %368 = vrot.lane.b32.xlu0 %v358, 113
    %v369 = vpop.permute.xlu0 %368
    %370 = vrot.lane.b32.xlu0 %v359, 113
    %v371 = vpop.permute.xlu0 %370
    %vm372 = vcmp.lt.s32.totalorder %v85, 113
    %v373 = vsel %vm372, %v369, %v371
    %v374 = vsel %vm372, %v367, %v369
    %v375 = vsel %vm372, %v365, %v367
    %v376 = vsel %vm372, %v371, %v365
    %v377 = vsel %vm49, 1, 0
    %v378 = vperm.slane %v377, 0
    %v379 = vperm.slane %v377, 1
    %v380 = vperm.slane %v377, 2
    %v381 = vperm.slane %v377, 3
    %vm382 = vcmp.eq.s32.totalorder %v378, 1
    %vm383 = vcmp.eq.s32.totalorder %v379, 1
    %vm384 = vcmp.eq.s32.totalorder %v380, 1
    %vm385 = vcmp.eq.s32.totalorder %v381, 1
    %v386 = vsel %vm382, %v375, 0.0
    %v387 = vsel %vm383, %v374, 0.0
    %v388 = vsel %vm384, %v373, 0.0
    %v389 = vsel %vm385, %v376, 0.0
    %390 = vset.pattern.permute.xlu0 6
    %391 = vperm.xlu0 %390, %v51
    %v392 = vpop.permute.xlu0 %391
    %v394 = vmul.f32 %v386, %v392
    %v395 = vmul.f32 %v387, %v392
    %v396 = vmul.f32 %v388, %v392
    %v397 = vmul.f32 %v389, %v392
    %v402 = vrot.slane %v395, 4
    %v403 = vrot.slane %v397, 4
    %v404 = vsel %vm118, %v394, %v402
    %v405 = vsel %vm118, %v396, %v403
    %v408 = vadd.f32 %v351, %v404
    %v409 = vadd.f32 %v352, %v405
    %410 = vst [vmem:[#allocation1] ss:$2 sm:$0xff] %v39
    %s411 = scalar_lea.vmem [#allocation1], 16
    %412 = vst [vmem:[%s411] ss:$2 sm:$0xff] %v40
    %v413 = vld.sshfl [vmem:[#allocation1] sm:$0xff pattern:$0x75316420]
    %v414 = vld.sshfl [vmem:[#allocation1 + $0x8] sm:$0xff pattern:$0x75316420]
    %v415 = vld.sshfl [vmem:[#allocation1 + $0x10] sm:$0xff pattern:$0x75316420]
    %v416 = vld.sshfl [vmem:[#allocation1 + $0x18] sm:$0xff pattern:$0x75316420]
    %421 = vrot.lane.b32.xlu0 %v413, 112
    %v422 = vpop.permute.xlu0 %421
    %423 = vrot.lane.b32.xlu0 %v414, 112
    %v424 = vpop.permute.xlu0 %423
    %425 = vrot.lane.b32.xlu0 %v415, 112
    %v426 = vpop.permute.xlu0 %425
    %427 = vrot.lane.b32.xlu0 %v416, 112
    %v428 = vpop.permute.xlu0 %427
    %vm429 = vcmp.lt.s32.totalorder %v85, 112
    %v430 = vsel %vm429, %v426, %v428
    %v431 = vsel %vm429, %v424, %v426
    %v432 = vsel %vm429, %v422, %v424
    %v433 = vsel %vm429, %v428, %v422
    %v434 = vsel %vm44, 1, 0
    %v435 = vperm.slane %v434, 0
    %v436 = vperm.slane %v434, 1
    %v437 = vperm.slane %v434, 2
    %v438 = vperm.slane %v434, 3
    %vm439 = vcmp.eq.s32.totalorder %v435, 1
    %vm440 = vcmp.eq.s32.totalorder %v436, 1
    %vm441 = vcmp.eq.s32.totalorder %v437, 1
    %vm442 = vcmp.eq.s32.totalorder %v438, 1
    %v443 = vsel %vm439, %v432, 0.0
    %v444 = vsel %vm440, %v431, 0.0
    %v445 = vsel %vm441, %v430, 0.0
    %v446 = vsel %vm442, %v433, 0.0
    %447 = vset.pattern.permute.xlu0 7
    %448 = vperm.xlu0 %447, %v51
    %v449 = vpop.permute.xlu0 %448
    %v451 = vmul.f32 %v443, %v449
    %v452 = vmul.f32 %v444, %v449
    %v453 = vmul.f32 %v445, %v449
    %v454 = vmul.f32 %v446, %v449
    %v459 = vrot.slane %v452, 4
    %v460 = vrot.slane %v454, 4
    %v461 = vsel %vm118, %v451, %v459
    %v462 = vsel %vm118, %v453, %v460
    %v465 = vadd.f32 %v408, %v461
    %v466 = vadd.f32 %v409, %v462
    %467 = vst [vmem:[#allocation1] ss:$2 sm:$0xff] %v39
    %s468 = scalar_lea.vmem [#allocation1], 16
    %469 = vst [vmem:[%s468] ss:$2 sm:$0xff] %v40
    %v470 = vld.sshfl [vmem:[#allocation1] sm:$0xff pattern:$0x75316420]
    %v471 = vld.sshfl [vmem:[#allocation1 + $0x8] sm:$0xff pattern:$0x75316420]
    %v472 = vld.sshfl [vmem:[#allocation1 + $0x10] sm:$0xff pattern:$0x75316420]
    %v473 = vld.sshfl [vmem:[#allocation1 + $0x18] sm:$0xff pattern:$0x75316420]
    %478 = vrot.lane.b32.xlu0 %v470, 111
    %v479 = vpop.permute.xlu0 %478
    %480 = vrot.lane.b32.xlu0 %v471, 111
    %v481 = vpop.permute.xlu0 %480
    %482 = vrot.lane.b32.xlu0 %v472, 111
    %v483 = vpop.permute.xlu0 %482
    %484 = vrot.lane.b32.xlu0 %v473, 111
    %v485 = vpop.permute.xlu0 %484
    %vm486 = vcmp.lt.s32.totalorder %v85, 111
    %v487 = vsel %vm486, %v483, %v485
    %v488 = vsel %vm486, %v481, %v483
    %v489 = vsel %vm486, %v479, %v481
    %v490 = vsel %vm486, %v485, %v479
    %v491 = vsel %vm50, 1, 0
    %v492 = vperm.slane %v491, 0
    %v493 = vperm.slane %v491, 1
    %v494 = vperm.slane %v491, 2
    %v495 = vperm.slane %v491, 3
    %vm496 = vcmp.eq.s32.totalorder %v492, 1
    %vm497 = vcmp.eq.s32.totalorder %v493, 1
    %vm498 = vcmp.eq.s32.totalorder %v494, 1
    %vm499 = vcmp.eq.s32.totalorder %v495, 1
    %v500 = vsel %vm496, %v489, 0.0
    %v501 = vsel %vm497, %v488, 0.0
    %v502 = vsel %vm498, %v487, 0.0
    %v503 = vsel %vm499, %v490, 0.0
    %504 = vset.pattern.permute.xlu0 8
    %505 = vperm.xlu0 %504, %v51
    %v506 = vpop.permute.xlu0 %505
    %v508 = vmul.f32 %v500, %v506
    %v509 = vmul.f32 %v501, %v506
    %v510 = vmul.f32 %v502, %v506
    %v511 = vmul.f32 %v503, %v506
    %v516 = vrot.slane %v509, 4
    %v517 = vrot.slane %v511, 4
    %v518 = vsel %vm118, %v508, %v516
    %v519 = vsel %vm118, %v510, %v517
    %v522 = vadd.f32 %v465, %v518
    %v523 = vadd.f32 %v466, %v519
    %v524 = vld [vmem:[%s4] sm:$0xff]
    %v527 = vperm.slane %v522, 0
    %v528 = vperm.slane %v522, 4
    %v529 = vperm.slane %v523, 0
    %v530 = vperm.slane %v523, 4
    %v535 = vperm.slane %v527, 0
    %v536 = vperm.slane %v528, 0
    %v537 = vperm.slane %v529, 0
    %v538 = vperm.slane %v530, 0
    %540 = vset.pattern.permute.xlu0 0
    %541 = vperm.xlu0 %540, %v524
    %v542 = vpop.permute.xlu0 %541
    %v544 = vmul.f32 %v535, %v542
    %v545 = vmul.f32 %v536, %v542
    %v546 = vmul.f32 %v537, %v542
    %v547 = vmul.f32 %v538, %v542
    %v548 = vperm.slane %v522, 1
    %v549 = vperm.slane %v522, 5
    %v550 = vperm.slane %v523, 1
    %v551 = vperm.slane %v523, 5
    %v556 = vperm.slane %v548, 1
    %v557 = vperm.slane %v549, 1
    %v558 = vperm.slane %v550, 1
    %v559 = vperm.slane %v551, 1
    %560 = vset.pattern.permute.xlu0 1
    %561 = vperm.xlu0 %560, %v524
    %v562 = vpop.permute.xlu0 %561
    %v564 = vmul.f32 %v556, %v562
    %v565 = vmul.f32 %v557, %v562
    %v566 = vmul.f32 %v558, %v562
    %v567 = vmul.f32 %v559, %v562
    %v568 = vadd.f32 %v544, %v564
    %v569 = vadd.f32 %v545, %v565
    %v570 = vadd.f32 %v546, %v566
    %v571 = vadd.f32 %v547, %v567
    %v572 = vperm.slane %v522, 2
    %v573 = vperm.slane %v522, 6
    %v574 = vperm.slane %v523, 2
    %v575 = vperm.slane %v523, 6
    %v580 = vperm.slane %v572, 2
    %v581 = vperm.slane %v573, 2
    %v582 = vperm.slane %v574, 2
    %v583 = vperm.slane %v575, 2
    %584 = vset.pattern.permute.xlu0 2
    %585 = vperm.xlu0 %584, %v524
    %v586 = vpop.permute.xlu0 %585
    %v588 = vmul.f32 %v580, %v586
    %v589 = vmul.f32 %v581, %v586
    %v590 = vmul.f32 %v582, %v586
    %v591 = vmul.f32 %v583, %v586
    %v592 = vadd.f32 %v568, %v588
    %v593 = vadd.f32 %v569, %v589
    %v594 = vadd.f32 %v570, %v590
    %v595 = vadd.f32 %v571, %v591
    %v596 = vperm.slane %v522, 3
    %v597 = vperm.slane %v522, 7
    %v598 = vperm.slane %v523, 3
    %v599 = vperm.slane %v523, 7
    %v604 = vperm.slane %v596, 3
    %v605 = vperm.slane %v597, 3
    %v606 = vperm.slane %v598, 3
    %v607 = vperm.slane %v599, 3
    %608 = vset.pattern.permute.xlu0 3
    %609 = vperm.xlu0 %608, %v524
    %v610 = vpop.permute.xlu0 %609
    %v612 = vmul.f32 %v604, %v610
    %v613 = vmul.f32 %v605, %v610
    %v614 = vmul.f32 %v606, %v610
    %v615 = vmul.f32 %v607, %v610
    %v616 = vadd.f32 %v592, %v612
    %v617 = vadd.f32 %v593, %v613
    %v618 = vadd.f32 %v594, %v614
    %v619 = vadd.f32 %v595, %v615
    %v620 = vld [vmem:[%s5] sm:$0xff]
    %622 = vset.pattern.permute.xlu0 0
    %623 = vperm.xlu0 %622, %v620
    %v624 = vpop.permute.xlu0 %623
    %v626 = vadd.f32 %v616, %v624
    %v627 = vadd.f32 %v617, %v624
    %v628 = vadd.f32 %v618, %v624
    %v629 = vadd.f32 %v619, %v624
    %v630 = vmax.f32 %v626, 0.0
    %v631 = vmax.f32 %v627, 0.0
    %v632 = vmax.f32 %v628, 0.0
    %v633 = vmax.f32 %v629, 0.0
    %v634 = vld [vmem:[%s6] sm:$0xff]
    %636 = vset.pattern.permute.xlu0 4
    %637 = vperm.xlu0 %636, %v634
    %v638 = vpop.permute.xlu0 %637
    %v640 = vmul.f32 %v630, %v638
    %v641 = vmul.f32 %v631, %v638
    %v642 = vmul.f32 %v632, %v638
    %v643 = vmul.f32 %v633, %v638
    %644 = vrot.lane.b32.xlu0 %v630, 17
    %v645 = vpop.permute.xlu0 %644
    %646 = vrot.lane.b32.xlu0 %v631, 17
    %v647 = vpop.permute.xlu0 %646
    %648 = vrot.lane.b32.xlu0 %v632, 17
    %v649 = vpop.permute.xlu0 %648
    %650 = vrot.lane.b32.xlu0 %v633, 17
    %v651 = vpop.permute.xlu0 %650
    %v652 = vsel %vm86, %v649, %v651
    %v653 = vsel %vm86, %v647, %v649
    %v654 = vsel %vm86, %v645, %v647
    %v655 = vsel %vm86, %v651, %v645
    %v656 = vsel %vm96, %v655, 0.0
    %v657 = vsel %vm97, %v654, 0.0
    %v658 = vsel %vm98, %v653, 0.0
    %v659 = vsel %vm99, %v652, 0.0
    %660 = vset.pattern.permute.xlu0 0
    %661 = vperm.xlu0 %660, %v634
    %v662 = vpop.permute.xlu0 %661
    %v664 = vmul.f32 %v656, %v662
    %v665 = vmul.f32 %v657, %v662
    %v666 = vmul.f32 %v658, %v662
    %v667 = vmul.f32 %v659, %v662
    %v668 = vadd.f32 %v640, %v664
    %v669 = vadd.f32 %v641, %v665
    %v670 = vadd.f32 %v642, %v666
    %v671 = vadd.f32 %v643, %v667
    %672 = vrot.lane.b32.xlu0 %v630, 16
    %v673 = vpop.permute.xlu0 %672
    %674 = vrot.lane.b32.xlu0 %v631, 16
    %v675 = vpop.permute.xlu0 %674
    %676 = vrot.lane.b32.xlu0 %v632, 16
    %v677 = vpop.permute.xlu0 %676
    %678 = vrot.lane.b32.xlu0 %v633, 16
    %v679 = vpop.permute.xlu0 %678
    %v680 = vsel %vm144, %v677, %v679
    %v681 = vsel %vm144, %v675, %v677
    %v682 = vsel %vm144, %v673, %v675
    %v683 = vsel %vm144, %v679, %v673
    %v684 = vsel %vm154, %v683, 0.0
    %v685 = vsel %vm155, %v682, 0.0
    %v686 = vsel %vm156, %v681, 0.0
    %v687 = vsel %vm157, %v680, 0.0
    %688 = vset.pattern.permute.xlu0 1
    %689 = vperm.xlu0 %688, %v634
    %v690 = vpop.permute.xlu0 %689
    %v692 = vmul.f32 %v684, %v690
    %v693 = vmul.f32 %v685, %v690
    %v694 = vmul.f32 %v686, %v690
    %v695 = vmul.f32 %v687, %v690
    %v696 = vadd.f32 %v668, %v692
    %v697 = vadd.f32 %v669, %v693
    %v698 = vadd.f32 %v670, %v694
    %v699 = vadd.f32 %v671, %v695
    %700 = vrot.lane.b32.xlu0 %v630, 15
    %v701 = vpop.permute.xlu0 %700
    %702 = vrot.lane.b32.xlu0 %v631, 15
    %v703 = vpop.permute.xlu0 %702
    %704 = vrot.lane.b32.xlu0 %v632, 15
    %v705 = vpop.permute.xlu0 %704
    %706 = vrot.lane.b32.xlu0 %v633, 15
    %v707 = vpop.permute.xlu0 %706
    %v708 = vsel %vm201, %v705, %v707
    %v709 = vsel %vm201, %v703, %v705
    %v710 = vsel %vm201, %v701, %v703
    %v711 = vsel %vm201, %v707, %v701
    %v712 = vsel %vm211, %v711, 0.0
    %v713 = vsel %vm212, %v710, 0.0
    %v714 = vsel %vm213, %v709, 0.0
    %v715 = vsel %vm214, %v708, 0.0
    %716 = vset.pattern.permute.xlu0 2
    %717 = vperm.xlu0 %716, %v634
    %v718 = vpop.permute.xlu0 %717
    %v720 = vmul.f32 %v712, %v718
    %v721 = vmul.f32 %v713, %v718
    %v722 = vmul.f32 %v714, %v718
    %v723 = vmul.f32 %v715, %v718
    %v724 = vadd.f32 %v696, %v720
    %v725 = vadd.f32 %v697, %v721
    %v726 = vadd.f32 %v698, %v722
    %v727 = vadd.f32 %v699, %v723
    %728 = vrot.lane.b32.xlu0 %v630, 1
    %v729 = vpop.permute.xlu0 %728
    %730 = vrot.lane.b32.xlu0 %v631, 1
    %v731 = vpop.permute.xlu0 %730
    %732 = vrot.lane.b32.xlu0 %v632, 1
    %v733 = vpop.permute.xlu0 %732
    %734 = vrot.lane.b32.xlu0 %v633, 1
    %v735 = vpop.permute.xlu0 %734
    %v736 = vsel %vm258, %v733, %v735
    %v737 = vsel %vm258, %v731, %v733
    %v738 = vsel %vm258, %v729, %v731
    %v739 = vsel %vm258, %v735, %v729
    %v740 = vsel %vm268, %v739, 0.0
    %v741 = vsel %vm269, %v738, 0.0
    %v742 = vsel %vm270, %v737, 0.0
    %v743 = vsel %vm271, %v736, 0.0
    %744 = vset.pattern.permute.xlu0 3
    %745 = vperm.xlu0 %744, %v634
    %v746 = vpop.permute.xlu0 %745
    %v748 = vmul.f32 %v740, %v746
    %v749 = vmul.f32 %v741, %v746
    %v750 = vmul.f32 %v742, %v746
    %v751 = vmul.f32 %v743, %v746
    %v752 = vadd.f32 %v724, %v748
    %v753 = vadd.f32 %v725, %v749
    %v754 = vadd.f32 %v726, %v750
    %v755 = vadd.f32 %v727, %v751
    %756 = vrot.lane.b32.xlu0 %v630, 127
    %v757 = vpop.permute.xlu0 %756
    %758 = vrot.lane.b32.xlu0 %v631, 127
    %v759 = vpop.permute.xlu0 %758
    %760 = vrot.lane.b32.xlu0 %v632, 127
    %v761 = vpop.permute.xlu0 %760
    %762 = vrot.lane.b32.xlu0 %v633, 127
    %v763 = vpop.permute.xlu0 %762
    %v764 = vsel %vm315, %v761, %v763
    %v765 = vsel %vm315, %v759, %v761
    %v766 = vsel %vm315, %v757, %v759
    %v767 = vsel %vm315, %v763, %v757
    %v768 = vsel %vm325, %v766, 0.0
    %v769 = vsel %vm326, %v765, 0.0
    %v770 = vsel %vm327, %v764, 0.0
    %v771 = vsel %vm328, %v767, 0.0
    %772 = vset.pattern.permute.xlu0 5
    %773 = vperm.xlu0 %772, %v634
    %v774 = vpop.permute.xlu0 %773
    %v776 = vmul.f32 %v768, %v774
    %v777 = vmul.f32 %v769, %v774
    %v778 = vmul.f32 %v770, %v774
    %v779 = vmul.f32 %v771, %v774
    %v780 = vadd.f32 %v752, %v776
    %v781 = vadd.f32 %v753, %v777
    %v782 = vadd.f32 %v754, %v778
    %v783 = vadd.f32 %v755, %v779
    %784 = vrot.lane.b32.xlu0 %v630, 113
    %v785 = vpop.permute.xlu0 %784
    %786 = vrot.lane.b32.xlu0 %v631, 113
    %v787 = vpop.permute.xlu0 %786
    %788 = vrot.lane.b32.xlu0 %v632, 113
    %v789 = vpop.permute.xlu0 %788
    %790 = vrot.lane.b32.xlu0 %v633, 113
    %v791 = vpop.permute.xlu0 %790
    %v792 = vsel %vm372, %v789, %v791
    %v793 = vsel %vm372, %v787, %v789
    %v794 = vsel %vm372, %v785, %v787
    %v795 = vsel %vm372, %v791, %v785
    %v796 = vsel %vm382, %v794, 0.0
    %v797 = vsel %vm383, %v793, 0.0
    %v798 = vsel %vm384, %v792, 0.0
    %v799 = vsel %vm385, %v795, 0.0
    %800 = vset.pattern.permute.xlu0 6
    %801 = vperm.xlu0 %800, %v634
    %v802 = vpop.permute.xlu0 %801
    %v804 = vmul.f32 %v796, %v802
    %v805 = vmul.f32 %v797, %v802
    %v806 = vmul.f32 %v798, %v802
    %v807 = vmul.f32 %v799, %v802
    %v808 = vadd.f32 %v780, %v804
    %v809 = vadd.f32 %v781, %v805
    %v810 = vadd.f32 %v782, %v806
    %v811 = vadd.f32 %v783, %v807
    %812 = vrot.lane.b32.xlu0 %v630, 112
    %v813 = vpop.permute.xlu0 %812
    %814 = vrot.lane.b32.xlu0 %v631, 112
    %v815 = vpop.permute.xlu0 %814
    %816 = vrot.lane.b32.xlu0 %v632, 112
    %v817 = vpop.permute.xlu0 %816
    %818 = vrot.lane.b32.xlu0 %v633, 112
    %v819 = vpop.permute.xlu0 %818
    %v820 = vsel %vm429, %v817, %v819
    %v821 = vsel %vm429, %v815, %v817
    %v822 = vsel %vm429, %v813, %v815
    %v823 = vsel %vm429, %v819, %v813
    %v824 = vsel %vm439, %v822, 0.0
    %v825 = vsel %vm440, %v821, 0.0
    %v826 = vsel %vm441, %v820, 0.0
    %v827 = vsel %vm442, %v823, 0.0
    %828 = vset.pattern.permute.xlu0 7
    %829 = vperm.xlu0 %828, %v634
    %v830 = vpop.permute.xlu0 %829
    %v832 = vmul.f32 %v824, %v830
    %v833 = vmul.f32 %v825, %v830
    %v834 = vmul.f32 %v826, %v830
    %v835 = vmul.f32 %v827, %v830
    %v836 = vadd.f32 %v808, %v832
    %v837 = vadd.f32 %v809, %v833
    %v838 = vadd.f32 %v810, %v834
    %v839 = vadd.f32 %v811, %v835
    %840 = vrot.lane.b32.xlu0 %v630, 111
    %v841 = vpop.permute.xlu0 %840
    %842 = vrot.lane.b32.xlu0 %v631, 111
    %v843 = vpop.permute.xlu0 %842
    %844 = vrot.lane.b32.xlu0 %v632, 111
    %v845 = vpop.permute.xlu0 %844
    %846 = vrot.lane.b32.xlu0 %v633, 111
    %v847 = vpop.permute.xlu0 %846
    %v848 = vsel %vm486, %v845, %v847
    %v849 = vsel %vm486, %v843, %v845
    %v850 = vsel %vm486, %v841, %v843
    %v851 = vsel %vm486, %v847, %v841
    %v852 = vsel %vm496, %v850, 0.0
    %v853 = vsel %vm497, %v849, 0.0
    %v854 = vsel %vm498, %v848, 0.0
    %v855 = vsel %vm499, %v851, 0.0
    %856 = vset.pattern.permute.xlu0 8
    %857 = vperm.xlu0 %856, %v634
    %v858 = vpop.permute.xlu0 %857
    %v860 = vmul.f32 %v852, %v858
    %v861 = vmul.f32 %v853, %v858
    %v862 = vmul.f32 %v854, %v858
    %v863 = vmul.f32 %v855, %v858
    %v864 = vadd.f32 %v836, %v860
    %v865 = vadd.f32 %v837, %v861
    %v866 = vadd.f32 %v838, %v862
    %v867 = vadd.f32 %v839, %v863
    %v868 = vld [vmem:[%s7] sm:$0xff]
    %v869 = vperm.slane %v864, 0
    %v870 = vperm.slane %v865, 0
    %v871 = vperm.slane %v866, 0
    %v872 = vperm.slane %v867, 0
    %874 = vset.pattern.permute.xlu0 0
    %875 = vperm.xlu0 %874, %v868
    %v876 = vpop.permute.xlu0 %875
    %v878 = vmul.f32 %v869, %v876
    %v879 = vmul.f32 %v870, %v876
    %v880 = vmul.f32 %v871, %v876
    %v881 = vmul.f32 %v872, %v876
    %v882 = vperm.slane %v864, 1
    %v883 = vperm.slane %v865, 1
    %v884 = vperm.slane %v866, 1
    %v885 = vperm.slane %v867, 1
    %886 = vset.pattern.permute.xlu0 1
    %887 = vperm.xlu0 %886, %v868
    %v888 = vpop.permute.xlu0 %887
    %v890 = vmul.f32 %v882, %v888
    %v891 = vmul.f32 %v883, %v888
    %v892 = vmul.f32 %v884, %v888
    %v893 = vmul.f32 %v885, %v888
    %v894 = vadd.f32 %v878, %v890
    %v895 = vadd.f32 %v879, %v891
    %v896 = vadd.f32 %v880, %v892
    %v897 = vadd.f32 %v881, %v893
    %v898 = vperm.slane %v864, 2
    %v899 = vperm.slane %v865, 2
    %v900 = vperm.slane %v866, 2
    %v901 = vperm.slane %v867, 2
    %902 = vset.pattern.permute.xlu0 2
    %903 = vperm.xlu0 %902, %v868
    %v904 = vpop.permute.xlu0 %903
    %v906 = vmul.f32 %v898, %v904
    %v907 = vmul.f32 %v899, %v904
    %v908 = vmul.f32 %v900, %v904
    %v909 = vmul.f32 %v901, %v904
    %v910 = vadd.f32 %v894, %v906
    %v911 = vadd.f32 %v895, %v907
    %v912 = vadd.f32 %v896, %v908
    %v913 = vadd.f32 %v897, %v909
    %v914 = vperm.slane %v864, 3
    %v915 = vperm.slane %v865, 3
    %v916 = vperm.slane %v866, 3
    %v917 = vperm.slane %v867, 3
    %918 = vset.pattern.permute.xlu0 3
    %919 = vperm.xlu0 %918, %v868
    %v920 = vpop.permute.xlu0 %919
    %v922 = vmul.f32 %v914, %v920
    %v923 = vmul.f32 %v915, %v920
    %v924 = vmul.f32 %v916, %v920
    %v925 = vmul.f32 %v917, %v920
    %v926 = vadd.f32 %v910, %v922
    %v927 = vadd.f32 %v911, %v923
    %v928 = vadd.f32 %v912, %v924
    %v929 = vadd.f32 %v913, %v925
    %v930 = vperm.slane %v864, 4
    %v931 = vperm.slane %v865, 4
    %v932 = vperm.slane %v866, 4
    %v933 = vperm.slane %v867, 4
    %934 = vset.pattern.permute.xlu0 4
    %935 = vperm.xlu0 %934, %v868
    %v936 = vpop.permute.xlu0 %935
    %v938 = vmul.f32 %v930, %v936
    %v939 = vmul.f32 %v931, %v936
    %v940 = vmul.f32 %v932, %v936
    %v941 = vmul.f32 %v933, %v936
    %v942 = vadd.f32 %v926, %v938
    %v943 = vadd.f32 %v927, %v939
    %v944 = vadd.f32 %v928, %v940
    %v945 = vadd.f32 %v929, %v941
    %v946 = vperm.slane %v864, 5
    %v947 = vperm.slane %v865, 5
    %v948 = vperm.slane %v866, 5
    %v949 = vperm.slane %v867, 5
    %950 = vset.pattern.permute.xlu0 5
    %951 = vperm.xlu0 %950, %v868
    %v952 = vpop.permute.xlu0 %951
    %v954 = vmul.f32 %v946, %v952
    %v955 = vmul.f32 %v947, %v952
    %v956 = vmul.f32 %v948, %v952
    %v957 = vmul.f32 %v949, %v952
    %v958 = vadd.f32 %v942, %v954
    %v959 = vadd.f32 %v943, %v955
    %v960 = vadd.f32 %v944, %v956
    %v961 = vadd.f32 %v945, %v957
    %v962 = vperm.slane %v864, 6
    %v963 = vperm.slane %v865, 6
    %v964 = vperm.slane %v866, 6
    %v965 = vperm.slane %v867, 6
    %966 = vset.pattern.permute.xlu0 6
    %967 = vperm.xlu0 %966, %v868
    %v968 = vpop.permute.xlu0 %967
    %v970 = vmul.f32 %v962, %v968
    %v971 = vmul.f32 %v963, %v968
    %v972 = vmul.f32 %v964, %v968
    %v973 = vmul.f32 %v965, %v968
    %v974 = vadd.f32 %v958, %v970
    %v975 = vadd.f32 %v959, %v971
    %v976 = vadd.f32 %v960, %v972
    %v977 = vadd.f32 %v961, %v973
    %v978 = vperm.slane %v864, 7
    %v979 = vperm.slane %v865, 7
    %v980 = vperm.slane %v866, 7
    %v981 = vperm.slane %v867, 7
    %982 = vset.pattern.permute.xlu0 7
    %983 = vperm.xlu0 %982, %v868
    %v984 = vpop.permute.xlu0 %983
    %v986 = vmul.f32 %v978, %v984
    %v987 = vmul.f32 %v979, %v984
    %v988 = vmul.f32 %v980, %v984
    %v989 = vmul.f32 %v981, %v984
    %v990 = vadd.f32 %v974, %v986
    %v991 = vadd.f32 %v975, %v987
    %v992 = vadd.f32 %v976, %v988
    %v993 = vadd.f32 %v977, %v989
    %v994 = vld [vmem:[%s8] sm:$0xff]
    %996 = vset.pattern.permute.xlu0 0
    %997 = vperm.xlu0 %996, %v994
    %v998 = vpop.permute.xlu0 %997
    %v1000 = vadd.f32 %v990, %v998
    %v1001 = vadd.f32 %v991, %v998
    %v1002 = vadd.f32 %v992, %v998
    %v1003 = vadd.f32 %v993, %v998
    %v1004 = vmax.f32 %v1000, 0.0
    %v1005 = vmax.f32 %v1001, 0.0
    %v1006 = vmax.f32 %v1002, 0.0
    %v1007 = vmax.f32 %v1003, 0.0
    %v1008 = vld [vmem:[%s9] sm:$0xff]
    %v1009 = vperm.slane %v39, 0
    %v1010 = vperm.slane %v39, 4
    %v1011 = vperm.slane %v40, 0
    %v1012 = vperm.slane %v40, 4
    %v1017 = vperm.slane %v1009, 0
    %v1018 = vperm.slane %v1010, 0
    %v1019 = vperm.slane %v1011, 0
    %v1020 = vperm.slane %v1012, 0
    %1022 = vset.pattern.permute.xlu0 0
    %1023 = vperm.xlu0 %1022, %v1008
    %v1024 = vpop.permute.xlu0 %1023
    %v1026 = vmul.f32 %v1017, %v1024
    %v1027 = vmul.f32 %v1018, %v1024
    %v1028 = vmul.f32 %v1019, %v1024
    %v1029 = vmul.f32 %v1020, %v1024
    %v1030 = vperm.slane %v39, 1
    %v1031 = vperm.slane %v39, 5
    %v1032 = vperm.slane %v40, 1
    %v1033 = vperm.slane %v40, 5
    %v1038 = vperm.slane %v1030, 1
    %v1039 = vperm.slane %v1031, 1
    %v1040 = vperm.slane %v1032, 1
    %v1041 = vperm.slane %v1033, 1
    %1042 = vset.pattern.permute.xlu0 1
    %1043 = vperm.xlu0 %1042, %v1008
    %v1044 = vpop.permute.xlu0 %1043
    %v1046 = vmul.f32 %v1038, %v1044
    %v1047 = vmul.f32 %v1039, %v1044
    %v1048 = vmul.f32 %v1040, %v1044
    %v1049 = vmul.f32 %v1041, %v1044
    %v1050 = vadd.f32 %v1026, %v1046
    %v1051 = vadd.f32 %v1027, %v1047
    %v1052 = vadd.f32 %v1028, %v1048
    %v1053 = vadd.f32 %v1029, %v1049
    %v1054 = vperm.slane %v39, 2
    %v1055 = vperm.slane %v39, 6
    %v1056 = vperm.slane %v40, 2
    %v1057 = vperm.slane %v40, 6
    %v1062 = vperm.slane %v1054, 2
    %v1063 = vperm.slane %v1055, 2
    %v1064 = vperm.slane %v1056, 2
    %v1065 = vperm.slane %v1057, 2
    %1066 = vset.pattern.permute.xlu0 2
    %1067 = vperm.xlu0 %1066, %v1008
    %v1068 = vpop.permute.xlu0 %1067
    %v1070 = vmul.f32 %v1062, %v1068
    %v1071 = vmul.f32 %v1063, %v1068
    %v1072 = vmul.f32 %v1064, %v1068
    %v1073 = vmul.f32 %v1065, %v1068
    %v1074 = vadd.f32 %v1050, %v1070
    %v1075 = vadd.f32 %v1051, %v1071
    %v1076 = vadd.f32 %v1052, %v1072
    %v1077 = vadd.f32 %v1053, %v1073
    %v1078 = vperm.slane %v39, 3
    %v1079 = vperm.slane %v39, 7
    %v1080 = vperm.slane %v40, 3
    %v1081 = vperm.slane %v40, 7
    %v1086 = vperm.slane %v1078, 3
    %v1087 = vperm.slane %v1079, 3
    %v1088 = vperm.slane %v1080, 3
    %v1089 = vperm.slane %v1081, 3
    %1090 = vset.pattern.permute.xlu0 3
    %1091 = vperm.xlu0 %1090, %v1008
    %v1092 = vpop.permute.xlu0 %1091
    %v1094 = vmul.f32 %v1086, %v1092
    %v1095 = vmul.f32 %v1087, %v1092
    %v1096 = vmul.f32 %v1088, %v1092
    %v1097 = vmul.f32 %v1089, %v1092
    %v1098 = vadd.f32 %v1074, %v1094
    %v1099 = vadd.f32 %v1075, %v1095
    %v1100 = vadd.f32 %v1076, %v1096
    %v1101 = vadd.f32 %v1077, %v1097
    %v1102 = vld [vmem:[%s10] sm:$0xff]
    %1104 = vset.pattern.permute.xlu0 0
    %1105 = vperm.xlu0 %1104, %v1102
    %v1106 = vpop.permute.xlu0 %1105
    %v1108 = vadd.f32 %v1098, %v1106
    %v1109 = vadd.f32 %v1099, %v1106
    %v1110 = vadd.f32 %v1100, %v1106
    %v1111 = vadd.f32 %v1101, %v1106
    %v1112 = vadd.f32 %v1004, %v1108
    %v1113 = vadd.f32 %v1005, %v1109
    %v1114 = vadd.f32 %v1006, %v1110
    %v1115 = vadd.f32 %v1007, %v1111
    %v1116 = vmax.f32 %v1112, 0.0
    %v1117 = vmax.f32 %v1113, 0.0
    %v1118 = vmax.f32 %v1114, 0.0
    %v1119 = vmax.f32 %v1115, 0.0
    %1120 = vst [vmem:[#allocation2] sm:$0xff] %v1116
    %1121 = vst [vmem:[#allocation2 + $0x8] sm:$0xff] %v1117
    %1122 = vst [vmem:[#allocation2 + $0x10] sm:$0xff] %v1118
    %1123 = vst [vmem:[#allocation2 + $0x18] sm:$0xff] %v1119
    // Predicated region
    $region46: #{tpu_custom_call.1} parent=1 // pred_check
      _
    $region47: #{tpu_custom_call.1} parent=1 // pred_check_branch
      %1125 = sbr.rel (0) target = $region49
    $region48: #{tpu_custom_call.1} parent=1 // pred_region
      %1127 = vsyncadd [#allocation3], 0
      %s1129 = sshll.u32 [#allocation2], 4
      %s1130 = int_to_ptr.vmem [resolvable:$true] %s1129
      %s1131 = sshll.u32 %s11, 4
      %s1132 = int_to_ptr.hbm [resolvable:$true] %s1131
      %1134 = dma.vmem_to_hbm [thread:$0]  %s1130, 512, %s1132, [#allocation3]
    $region49: #{tpu_custom_call.1} parent=1 // pred_fallthru
      _
    // Predicated region
    $region50: #{tpu_custom_call.1} parent=1 // pred_check
      _
    $region51: #{tpu_custom_call.1} parent=1 // pred_check_branch
      %1136 = sbr.rel (0) target = $region53
    $region52: #{tpu_custom_call.1} parent=1 // pred_region
      %1138 = dma.done [#allocation3], 512
    $region53: #{tpu_custom_call.1} parent=1 // pred_fallthru
      _
    %1139 = vsyncpa [#allocation3], 1

</llo_original>
